<compile_context>
chip_gen: v7x
topology: tpu7x:2x2x1
jax: 0.10.0
libtpu: 0.0.40
codegen_flags: <defaults>
</compile_context>

<pallas_src>
import numpy as np
import jax
import jax.numpy as jnp
from jax.experimental import pallas as pl
from jax.experimental.pallas import tpu as pltpu


# ----------------------------------------------------------------------------
# Kernel
# ----------------------------------------------------------------------------
def _make_kernel(S: int, Bp: int, H: int):
    G2 = 2 * H   # one interleaved gate group: [fwd | bwd], each H lanes wide

    def kernel(x_aug_ref, w_emb_ref, b_emb_ref,
               w_ih_ref, w_hh_ref, b_g_ref,
               w_a1_ref, b_a1_ref, w_a2_ref, b_a2_ref,
               w_lab1_ref, w_lab2_ref, b_lab_ref,
               out_ref,
               gin_ref, hseq_ref):
        # ---- 1) embed [x(s) | x(S-1-s)] (dropout == identity at inference) and hoist
        #         the WHOLE LSTM input projection + biases out of the recurrence.
        emb_aug = jnp.tanh(
            jnp.dot(x_aug_ref[...], w_emb_ref[...],
                    preferred_element_type=jnp.float32) + b_emb_ref[...])     # (S*Bp, 2*Hh)
        gin_ref[...] = (
            jnp.dot(emb_aug, w_ih_ref[...], preferred_element_type=jnp.float32)
            + b_g_ref[...])                                                   # (S*Bp, 8H)

        w_hh = w_hh_ref[...]   # (2H, 8H) block-diagonal, gate-interleaved

        # ---- 2) fused bidirectional recurrence: one matmul per timestep.
        #         h/c carry layout: lanes [0:H] = forward state, [H:2H] = backward state.
        h = jnp.zeros((Bp, 2 * H), jnp.float32)
        c = jnp.zeros((Bp, 2 * H), jnp.float32)

        # S is a static Python int: the loop fully unrolls with static slice offsets
        # (equivalent to lax.fori_loop(0, S, body, carry, unroll=True)).
        for s in range(S):
            row_f = s * Bp              # forward direction consumes timestep s
            row_b = (S - 1 - s) * Bp    # backward direction consumes timestep S-1-s
            gates = gin_ref[pl.ds(row_f, Bp), :] + jnp.dot(
                h, w_hh, preferred_element_type=jnp.float32)                  # (Bp, 8H)
            sig = jax.nn.sigmoid(gates)                                       # full-tile EUP
            i_g = sig[:, 0:G2]
            f_g = sig[:, G2:2 * G2]
            g_g = jnp.tanh(gates[:, 2 * G2:3 * G2])
            o_g = sig[:, 3 * G2:4 * G2]
            c = f_g * c + i_g * g_g
            h = o_g * jnp.tanh(c)
            # forward half belongs to timestep s, backward half to timestep S-1-s
            hseq_ref[pl.ds(row_f, Bp), 0:H] = h[:, 0:H]
            hseq_ref[pl.ds(row_b, Bp), H:2 * H] = h[:, H:2 * H]

        # ---- 3) self-attention MLP: Linear(2H,2H) -> ReLU -> Linear(2H,1)
        out2d = hseq_ref[...]                                                 # (S*Bp, 2H)
        a1 = jnp.maximum(
            jnp.dot(out2d, w_a1_ref[...], preferred_element_type=jnp.float32)
            + b_a1_ref[...], 0.0)
        e = (jnp.dot(a1, w_a2_ref[...], preferred_element_type=jnp.float32)
             + b_a2_ref[...])                                                 # (S*Bp, 1); scale folded in
        attn = jax.nn.softmax(e.reshape(S, Bp, 1), axis=0)                    # softmax over sequence

        # ---- 4) weighted + plain pooling, final linear (w_lab split in halves -> no concat)
        hseq3 = out2d.reshape(S, Bp, 2 * H)
        final1 = jnp.sum(hseq3 * attn, axis=0)                                # (Bp, 2H)
        final2 = jnp.sum(hseq3, axis=0)                                       # (Bp, 2H)
        logits = (jnp.dot(final1, w_lab1_ref[...], preferred_element_type=jnp.float32)
                  + jnp.dot(final2, w_lab2_ref[...], preferred_element_type=jnp.float32)
                  + b_lab_ref[...])
        out_ref[...] = logits

    return kernel


# ----------------------------------------------------------------------------
# Wrapper
# ----------------------------------------------------------------------------
def attention_model_forward(x, kparams, hidden_dim):
    """x: (B, S, D_in) float32 -> logits (B, output_dim)."""
    B, S, Din = x.shape
    H = hidden_dim
    Bp = ((B + 7) // 8) * 8                 # pad batch to a full sublane group
    O = kparams["b_lab"].shape[1]

    # Glue: zero-pad batch, go sequence-major, and pair each timestep with its
    # time-reversed counterpart so both LSTM directions' input projections come
    # out of a single kernel matmul.
    x_pad = jnp.zeros((Bp, S, Din), jnp.float32).at[:B].set(x)
    x_seq = jnp.transpose(x_pad, (1, 0, 2))                                   # (S, Bp, Din)
    x_aug = jnp.concatenate([x_seq, x_seq[::-1]], axis=-1).reshape(S * Bp, 2 * Din)

    vmem = pl.BlockSpec(memory_space=pltpu.MemorySpace.VMEM)
    kernel = _make_kernel(S, Bp, H)

    logits = pl.pallas_call(
        kernel,
        out_shape=jax.ShapeDtypeStruct((Bp, O), jnp.float32),
        in_specs=[vmem] * 13,
        out_specs=vmem,
        scratch_shapes=[
            pltpu.VMEM((S * Bp, 8 * H), jnp.float32),   # hoisted input-side gate pre-activations
            pltpu.VMEM((S * Bp, 2 * H), jnp.float32),   # bidirectional hidden-state sequence
        ],
    )(x_aug,
      kparams["w_emb_aug"], kparams["b_emb_aug"],
      kparams["w_ih"], kparams["w_hh"], kparams["b_g"],
      kparams["w_a1"], kparams["b_a1"], kparams["w_a2"], kparams["b_a2"],
      kparams["w_lab1"], kparams["w_lab2"], kparams["b_lab"])
    return logits[:B]


# ----------------------------------------------------------------------------
# One-time parameter preparation: fuse / permute / fold the reference params
# into the kernel layout (all done outside the kernel).
# ----------------------------------------------------------------------------
def prepare_kernel_params(p, input_dim, hidden_dim):
    H = hidden_dim
    Hh = H // 2
    Din = input_dim
    scale = 1.0 / float(np.sqrt(H))

    # Embedding duplicated block-diagonally: one matmul embeds both the forward
    # and the time-reversed copy of the input.
    w_emb_aug = jnp.zeros((2 * Din, 2 * Hh), jnp.float32)
    w_emb_aug = w_emb_aug.at[:Din, :Hh].set(p["w_emb"]).at[Din:, Hh:].set(p["w_emb"])
    b_emb_aug = jnp.concatenate([p["b_emb"], p["b_emb"]], axis=1)             # (1, 2*Hh)

    # Fused LSTM weights, gate lanes interleaved [i_f i_b | f_f f_b | g_f g_b | o_f o_b].
    W_ih = jnp.zeros((2 * Hh, 8 * H), jnp.float32)
    W_hh = jnp.zeros((2 * H, 8 * H), jnp.float32)
    b_g = jnp.zeros((1, 8 * H), jnp.float32)
    bf = p["b_f"][0]
    bb = p["b_b"][0]
    for k in range(4):                       # gate order i, f, g, o (PyTorch convention)
        src = slice(k * H, (k + 1) * H)
        dst_f = slice(2 * k * H, 2 * k * H + H)
        dst_b = slice(2 * k * H + H, 2 * (k + 1) * H)
        W_ih = W_ih.at[:Hh, dst_f].set(p["w_ih_f"][:, src])
        W_ih = W_ih.at[Hh:, dst_b].set(p["w_ih_b"][:, src])
        W_hh = W_hh.at[:H, dst_f].set(p["w_hh_f"][:, src])
        W_hh = W_hh.at[H:, dst_b].set(p["w_hh_b"][:, src])
        b_g = b_g.at[0, dst_f].set(bf[src])
        b_g = b_g.at[0, dst_b].set(bb[src])

    return {
        "w_emb_aug": w_emb_aug, "b_emb_aug": b_emb_aug,
        "w_ih": W_ih, "w_hh": W_hh, "b_g": b_g,
        "w_a1": p["w_a1"], "b_a1": p["b_a1"],
        "w_a2": p["w_a2"] * scale, "b_a2": p["b_a2"] * scale,   # fold 1/sqrt(H) softmax scale
        "w_lab1": p["w_lab"][:2 * H], "w_lab2": p["w_lab"][2 * H:],
        "b_lab": p["b_lab"],
    }


# ----------------------------------------------------------------------------
# Deterministic parameter init (mirrors the PyTorch module's shapes)
# ----------------------------------------------------------------------------
def init_params(key, input_dim, hidden_dim, output_dim):
    H = hidden_dim
    Hh = H // 2
    keys = jax.random.split(key, 16)

    def unif(k, shape, fan_in):
        bound = 1.0 / np.sqrt(fan_in)
        return jax.random.uniform(k, shape, jnp.float32, -bound, bound)

    p = {}
    # input_embeded: Linear(input_dim, hidden_dim // 2)
    p["w_emb"] = unif(keys[0], (input_dim, Hh), input_dim)
    p["b_emb"] = unif(keys[1], (1, Hh), input_dim)

    # LSTM (num_layers=1, bidirectional). PyTorch stores (4H, in)/(4H, H); we keep
    # transposed weights and the summed bias (forget-gate bias filled with 1.0 in
    # BOTH b_ih and b_hh, as the module's __init__ does).
    # TODO(synk): stacked LSTM (recurrent_layers > 1) not implemented; example uses 1 layer.
    def lstm_dir(k0, k1, k2, k3, in_size):
        w_ih = unif(k0, (4 * H, in_size), H)
        w_hh = unif(k1, (4 * H, H), H)
        b_ih = unif(k2, (4 * H,), H).at[H:2 * H].set(1.0)
        b_hh = unif(k3, (4 * H,), H).at[H:2 * H].set(1.0)
        return w_ih.T, w_hh.T, (b_ih + b_hh)[None, :]

    p["w_ih_f"], p["w_hh_f"], p["b_f"] = lstm_dir(keys[2], keys[3], keys[4], keys[5], Hh)
    p["w_ih_b"], p["w_hh_b"], p["b_b"] = lstm_dir(keys[6], keys[7], keys[8], keys[9], Hh)

    # self_attention: Linear(2H, 2H) -> ReLU -> Linear(2H, 1)
    p["w_a1"] = unif(keys[10], (2 * H, 2 * H), 2 * H)
    p["b_a1"] = unif(keys[11], (1, 2 * H), 2 * H)
    p["w_a2"] = unif(keys[12], (2 * H, 1), 2 * H)
    p["b_a2"] = unif(keys[13], (1, 1), 2 * H)

    # label: Linear(4H, output_dim)   (output_linear is unused in forward)
    p["w_lab"] = unif(keys[14], (4 * H, output_dim), 4 * H)
    p["b_lab"] = unif(keys[15], (1, output_dim), 4 * H)
    return p


# ----------------------------------------------------------------------------
# Pure-JAX reference (same math) for a correctness check
# ----------------------------------------------------------------------------
def reference_forward(x, params, hidden_dim):
    H = hidden_dim
    B, S, Din = x.shape
    emb = jnp.tanh(x @ params["w_emb"] + params["b_emb"])      # (B, S, Hh)
    emb = jnp.transpose(emb, (1, 0, 2))                        # (S, B, Hh)

    def run_dir(w_ih, w_hh, b, reverse):
        def step(carry, x_t):
            h, c = carry
            gates = x_t @ w_ih + h @ w_hh + b
            i = jax.nn.sigmoid(gates[:, :H])
            f = jax.nn.sigmoid(gates[:, H:2 * H])
            g = jnp.tanh(gates[:, 2 * H:3 * H])
            o = jax.nn.sigmoid(gates[:, 3 * H:])
            c = f * c + i * g
            h = o * jnp.tanh(c)
            return (h, c), h
        init = (jnp.zeros((B, H), jnp.float32), jnp.zeros((B, H), jnp.float32))
        xs = emb[::-1] if reverse else emb
        _, hs = jax.lax.scan(step, init, xs)
        return hs[::-1] if reverse else hs

    hf = run_dir(params["w_ih_f"], params["w_hh_f"], params["b_f"], False)
    hb = run_dir(params["w_ih_b"], params["w_hh_b"], params["b_b"], True)
    out_seq = jnp.concatenate([hf, hb], axis=-1)               # (S, B, 2H)

    out2d = out_seq.reshape(S * B, 2 * H)
    a1 = jnp.maximum(out2d @ params["w_a1"] + params["b_a1"], 0.0)
    a2 = a1 @ params["w_a2"] + params["b_a2"]
    attn = jax.nn.softmax(a2.reshape(S, B, 1) * (1.0 / np.sqrt(H)), axis=0)
    final1 = jnp.sum(out_seq * attn, axis=0)
    final2 = jnp.sum(out_seq, axis=0)
    combined = jnp.concatenate([final1, final2], axis=1)
    return combined @ params["w_lab"] + params["b_lab"]


# ----------------------------------------------------------------------------
if __name__ == "__main__":
    # module config: batch_size=4, input_dim=16, hidden_dim=32, output_dim=5,
    # recurrent_layers=1, dropout_p=0.0 (dropout == identity at inference)
    B, S, D_IN, HIDDEN, OUT = 4, 8, 16, 32, 5

    key = jax.random.PRNGKey(0)
    kx, kp = jax.random.split(key)
    x = jax.random.normal(kx, (B, S, D_IN), jnp.float32)
    params = init_params(kp, D_IN, HIDDEN, OUT)
    kparams = prepare_kernel_params(params, D_IN, HIDDEN)

    logits = attention_model_forward(x, kparams, HIDDEN)
    jax.block_until_ready(logits)
    assert logits.shape == (B, OUT)

    ref = reference_forward(x, params, HIDDEN)
    np.testing.assert_allclose(np.asarray(logits), np.asarray(ref),
                               rtol=1e-4, atol=1e-4)
    print("KERNEL_OK")
</pallas_src>

<mosaic_0001>
module attributes {stable_mosaic.version = 11 : i64} {
  func.func @kernel(%arg0: memref<64x32xf32, #tpu.memory_space<vmem>>, %arg1: memref<32x32xf32, #tpu.memory_space<vmem>>, %arg2: memref<1x32xf32, #tpu.memory_space<vmem>>, %arg3: memref<32x256xf32, #tpu.memory_space<vmem>>, %arg4: memref<64x256xf32, #tpu.memory_space<vmem>>, %arg5: memref<1x256xf32, #tpu.memory_space<vmem>>, %arg6: memref<64x64xf32, #tpu.memory_space<vmem>>, %arg7: memref<1x64xf32, #tpu.memory_space<vmem>>, %arg8: memref<64x1xf32, #tpu.memory_space<vmem>>, %arg9: memref<1x1xf32, #tpu.memory_space<vmem>>, %arg10: memref<64x5xf32, #tpu.memory_space<vmem>>, %arg11: memref<64x5xf32, #tpu.memory_space<vmem>>, %arg12: memref<1x5xf32, #tpu.memory_space<vmem>>, %arg13: memref<8x5xf32, #tpu.memory_space<vmem>>, %arg14: memref<64x256xf32, #tpu.memory_space<vmem>>, %arg15: memref<64x64xf32, #tpu.memory_space<vmem>>) attributes {dimension_semantics = [], scalar_prefetch = 0 : i64, scratch_operands = 2 : i64, tpu.core_type = #tpu.core_type<tc>} {
    %c0 = arith.constant 0 : index
    %c0_0 = arith.constant 0 : index
    %0 = vector.load %arg0[%c0, %c0_0] : memref<64x32xf32, #tpu.memory_space<vmem>>, vector<64x32xf32>
    %c0_1 = arith.constant 0 : index
    %c0_2 = arith.constant 0 : index
    %1 = vector.load %arg1[%c0_1, %c0_2] : memref<32x32xf32, #tpu.memory_space<vmem>>, vector<32x32xf32>
    %cst = arith.constant dense<0.000000e+00> : vector<64x32xf32>
    %2 = tpu.matmul %0, %1, %cst {dimension_numbers = #tpu.dot_dimension_numbers<[1], [0], [0], [1], [0, 0, 1, 1], [], []>} : vector<64x32xf32>, vector<32x32xf32>, vector<64x32xf32> -> vector<64x32xf32>
    %c0_3 = arith.constant 0 : index
    %c0_4 = arith.constant 0 : index
    %3 = vector.load %arg2[%c0_3, %c0_4] : memref<1x32xf32, #tpu.memory_space<vmem>>, vector<1x32xf32>
    %4 = vector.broadcast %3 : vector<1x32xf32> to vector<64x32xf32>
    %5 = arith.addf %2, %4 : vector<64x32xf32>
    %6 = math.tanh %5 : vector<64x32xf32>
    %c0_5 = arith.constant 0 : index
    %c0_6 = arith.constant 0 : index
    %7 = vector.load %arg3[%c0_5, %c0_6] : memref<32x256xf32, #tpu.memory_space<vmem>>, vector<32x256xf32>
    %cst_7 = arith.constant dense<0.000000e+00> : vector<64x256xf32>
    %8 = tpu.matmul %6, %7, %cst_7 {dimension_numbers = #tpu.dot_dimension_numbers<[1], [0], [0], [1], [0, 0, 1, 1], [], []>} : vector<64x32xf32>, vector<32x256xf32>, vector<64x256xf32> -> vector<64x256xf32>
    %c0_8 = arith.constant 0 : index
    %c0_9 = arith.constant 0 : index
    %9 = vector.load %arg5[%c0_8, %c0_9] : memref<1x256xf32, #tpu.memory_space<vmem>>, vector<1x256xf32>
    %10 = vector.broadcast %9 : vector<1x256xf32> to vector<64x256xf32>
    %11 = arith.addf %8, %10 : vector<64x256xf32>
    %c0_10 = arith.constant 0 : index
    %c0_11 = arith.constant 0 : index
    %12 = vector.load %arg14[%c0_10, %c0_11] : memref<64x256xf32, #tpu.memory_space<vmem>>, vector<64x256xf32>
    tpu.vector_store %arg14[%c0_10, %c0_11], %11 {strides = array<i32>} : memref<64x256xf32, #tpu.memory_space<vmem>>, vector<64x256xf32>,
    %c0_12 = arith.constant 0 : index
    %c0_13 = arith.constant 0 : index
    %13 = vector.load %arg4[%c0_12, %c0_13] : memref<64x256xf32, #tpu.memory_space<vmem>>, vector<64x256xf32>
    %cst_14 = arith.constant 0.000000e+00 : f32
    %14 = vector.broadcast %cst_14 : f32 to vector<8x64xf32>
    %cst_15 = arith.constant 0.000000e+00 : f32
    %15 = vector.broadcast %cst_15 : f32 to vector<8x64xf32>
    %c0_16 = arith.constant 0 : index
    %c0_17 = arith.constant 0 : index
    %16 = vector.load %arg14[%c0_16, %c0_17] : memref<64x256xf32, #tpu.memory_space<vmem>>, vector<8x256xf32>
    %cst_18 = arith.constant dense<0.000000e+00> : vector<8x256xf32>
    %17 = tpu.matmul %14, %13, %cst_18 {dimension_numbers = #tpu.dot_dimension_numbers<[1], [0], [0], [1], [0, 0, 1, 1], [], []>} : vector<8x64xf32>, vector<64x256xf32>, vector<8x256xf32> -> vector<8x256xf32>
    %18 = arith.addf %16, %17 : vector<8x256xf32>
    %19 = arith.negf %18 : vector<8x256xf32>
    %20 = math.exp %19 : vector<8x256xf32>
    %cst_19 = arith.constant 1.000000e+00 : f32
    %21 = vector.broadcast %cst_19 : f32 to vector<8x256xf32>
    %22 = arith.addf %21, %20 : vector<8x256xf32>
    %23 = arith.divf %21, %22 : vector<8x256xf32>
    %24 = vector.extract_strided_slice %23 {offsets = [0, 0], sizes = [8, 64], strides = [1, 1]} : vector<8x256xf32> to vector<8x64xf32>
    %25 = vector.extract_strided_slice %23 {offsets = [0, 64], sizes = [8, 64], strides = [1, 1]} : vector<8x256xf32> to vector<8x64xf32>
    %26 = vector.extract_strided_slice %18 {offsets = [0, 128], sizes = [8, 64], strides = [1, 1]} : vector<8x256xf32> to vector<8x64xf32>
    %27 = math.tanh %26 : vector<8x64xf32>
    %28 = vector.extract_strided_slice %23 {offsets = [0, 192], sizes = [8, 64], strides = [1, 1]} : vector<8x256xf32> to vector<8x64xf32>
    %29 = arith.mulf %25, %15 : vector<8x64xf32>
    %30 = arith.mulf %24, %27 : vector<8x64xf32>
    %31 = arith.addf %29, %30 : vector<8x64xf32>
    %32 = math.tanh %31 : vector<8x64xf32>
    %33 = arith.mulf %28, %32 : vector<8x64xf32>
    %34 = vector.extract_strided_slice %33 {offsets = [0, 0], sizes = [8, 32], strides = [1, 1]} : vector<8x64xf32> to vector<8x32xf32>
    %c0_20 = arith.constant 0 : index
    %c0_21 = arith.constant 0 : index
    %35 = vector.load %arg15[%c0_20, %c0_21] : memref<64x64xf32, #tpu.memory_space<vmem>>, vector<8x32xf32>
    tpu.vector_store %arg15[%c0_20, %c0_21], %34 {strides = array<i32>} : memref<64x64xf32, #tpu.memory_space<vmem>>, vector<8x32xf32>,
    %36 = vector.extract_strided_slice %33 {offsets = [0, 32], sizes = [8, 32], strides = [1, 1]} : vector<8x64xf32> to vector<8x32xf32>
    %c56 = arith.constant 56 : index
    %c32 = arith.constant 32 : index
    %37 = vector.load %arg15[%c56, %c32] : memref<64x64xf32, #tpu.memory_space<vmem>>, vector<8x32xf32>
    tpu.vector_store %arg15[%c56, %c32], %36 {strides = array<i32>} : memref<64x64xf32, #tpu.memory_space<vmem>>, vector<8x32xf32>,
    %c8 = arith.constant 8 : index
    %c0_22 = arith.constant 0 : index
    %38 = vector.load %arg14[%c8, %c0_22] : memref<64x256xf32, #tpu.memory_space<vmem>>, vector<8x256xf32>
    %cst_23 = arith.constant dense<0.000000e+00> : vector<8x256xf32>
    %39 = tpu.matmul %33, %13, %cst_23 {dimension_numbers = #tpu.dot_dimension_numbers<[1], [0], [0], [1], [0, 0, 1, 1], [], []>} : vector<8x64xf32>, vector<64x256xf32>, vector<8x256xf32> -> vector<8x256xf32>
    %40 = arith.addf %38, %39 : vector<8x256xf32>
    %41 = arith.negf %40 : vector<8x256xf32>
    %42 = math.exp %41 : vector<8x256xf32>
    %cst_24 = arith.constant 1.000000e+00 : f32
    %43 = vector.broadcast %cst_24 : f32 to vector<8x256xf32>
    %44 = arith.addf %43, %42 : vector<8x256xf32>
    %45 = arith.divf %43, %44 : vector<8x256xf32>
    %46 = vector.extract_strided_slice %45 {offsets = [0, 0], sizes = [8, 64], strides = [1, 1]} : vector<8x256xf32> to vector<8x64xf32>
    %47 = vector.extract_strided_slice %45 {offsets = [0, 64], sizes = [8, 64], strides = [1, 1]} : vector<8x256xf32> to vector<8x64xf32>
    %48 = vector.extract_strided_slice %40 {offsets = [0, 128], sizes = [8, 64], strides = [1, 1]} : vector<8x256xf32> to vector<8x64xf32>
    %49 = math.tanh %48 : vector<8x64xf32>
    %50 = vector.extract_strided_slice %45 {offsets = [0, 192], sizes = [8, 64], strides = [1, 1]} : vector<8x256xf32> to vector<8x64xf32>
    %51 = arith.mulf %47, %31 : vector<8x64xf32>
    %52 = arith.mulf %46, %49 : vector<8x64xf32>
    %53 = arith.addf %51, %52 : vector<8x64xf32>
    %54 = math.tanh %53 : vector<8x64xf32>
    %55 = arith.mulf %50, %54 : vector<8x64xf32>
    %56 = vector.extract_strided_slice %55 {offsets = [0, 0], sizes = [8, 32], strides = [1, 1]} : vector<8x64xf32> to vector<8x32xf32>
    %c8_25 = arith.constant 8 : index
    %c0_26 = arith.constant 0 : index
    %57 = vector.load %arg15[%c8_25, %c0_26] : memref<64x64xf32, #tpu.memory_space<vmem>>, vector<8x32xf32>
    tpu.vector_store %arg15[%c8_25, %c0_26], %56 {strides = array<i32>} : memref<64x64xf32, #tpu.memory_space<vmem>>, vector<8x32xf32>,
    %58 = vector.extract_strided_slice %55 {offsets = [0, 32], sizes = [8, 32], strides = [1, 1]} : vector<8x64xf32> to vector<8x32xf32>
    %c48 = arith.constant 48 : index
    %c32_27 = arith.constant 32 : index
    %59 = vector.load %arg15[%c48, %c32_27] : memref<64x64xf32, #tpu.memory_space<vmem>>, vector<8x32xf32>
    tpu.vector_store %arg15[%c48, %c32_27], %58 {strides = array<i32>} : memref<64x64xf32, #tpu.memory_space<vmem>>, vector<8x32xf32>,
    %c16 = arith.constant 16 : index
    %c0_28 = arith.constant 0 : index
    %60 = vector.load %arg14[%c16, %c0_28] : memref<64x256xf32, #tpu.memory_space<vmem>>, vector<8x256xf32>
    %cst_29 = arith.constant dense<0.000000e+00> : vector<8x256xf32>
    %61 = tpu.matmul %55, %13, %cst_29 {dimension_numbers = #tpu.dot_dimension_numbers<[1], [0], [0], [1], [0, 0, 1, 1], [], []>} : vector<8x64xf32>, vector<64x256xf32>, vector<8x256xf32> -> vector<8x256xf32>
    %62 = arith.addf %60, %61 : vector<8x256xf32>
    %63 = arith.negf %62 : vector<8x256xf32>
    %64 = math.exp %63 : vector<8x256xf32>
    %cst_30 = arith.constant 1.000000e+00 : f32
    %65 = vector.broadcast %cst_30 : f32 to vector<8x256xf32>
    %66 = arith.addf %65, %64 : vector<8x256xf32>
    %67 = arith.divf %65, %66 : vector<8x256xf32>
    %68 = vector.extract_strided_slice %67 {offsets = [0, 0], sizes = [8, 64], strides = [1, 1]} : vector<8x256xf32> to vector<8x64xf32>
    %69 = vector.extract_strided_slice %67 {offsets = [0, 64], sizes = [8, 64], strides = [1, 1]} : vector<8x256xf32> to vector<8x64xf32>
    %70 = vector.extract_strided_slice %62 {offsets = [0, 128], sizes = [8, 64], strides = [1, 1]} : vector<8x256xf32> to vector<8x64xf32>
    %71 = math.tanh %70 : vector<8x64xf32>
    %72 = vector.extract_strided_slice %67 {offsets = [0, 192], sizes = [8, 64], strides = [1, 1]} : vector<8x256xf32> to vector<8x64xf32>
    %73 = arith.mulf %69, %53 : vector<8x64xf32>
    %74 = arith.mulf %68, %71 : vector<8x64xf32>
    %75 = arith.addf %73, %74 : vector<8x64xf32>
    %76 = math.tanh %75 : vector<8x64xf32>
    %77 = arith.mulf %72, %76 : vector<8x64xf32>
    %78 = vector.extract_strided_slice %77 {offsets = [0, 0], sizes = [8, 32], strides = [1, 1]} : vector<8x64xf32> to vector<8x32xf32>
    %c16_31 = arith.constant 16 : index
    %c0_32 = arith.constant 0 : index
    %79 = vector.load %arg15[%c16_31, %c0_32] : memref<64x64xf32, #tpu.memory_space<vmem>>, vector<8x32xf32>
    tpu.vector_store %arg15[%c16_31, %c0_32], %78 {strides = array<i32>} : memref<64x64xf32, #tpu.memory_space<vmem>>, vector<8x32xf32>,
    %80 = vector.extract_strided_slice %77 {offsets = [0, 32], sizes = [8, 32], strides = [1, 1]} : vector<8x64xf32> to vector<8x32xf32>
    %c40 = arith.constant 40 : index
    %c32_33 = arith.constant 32 : index
    %81 = vector.load %arg15[%c40, %c32_33] : memref<64x64xf32, #tpu.memory_space<vmem>>, vector<8x32xf32>
    tpu.vector_store %arg15[%c40, %c32_33], %80 {strides = array<i32>} : memref<64x64xf32, #tpu.memory_space<vmem>>, vector<8x32xf32>,
    %c24 = arith.constant 24 : index
    %c0_34 = arith.constant 0 : index
    %82 = vector.load %arg14[%c24, %c0_34] : memref<64x256xf32, #tpu.memory_space<vmem>>, vector<8x256xf32>
    %cst_35 = arith.constant dense<0.000000e+00> : vector<8x256xf32>
    %83 = tpu.matmul %77, %13, %cst_35 {dimension_numbers = #tpu.dot_dimension_numbers<[1], [0], [0], [1], [0, 0, 1, 1], [], []>} : vector<8x64xf32>, vector<64x256xf32>, vector<8x256xf32> -> vector<8x256xf32>
    %84 = arith.addf %82, %83 : vector<8x256xf32>
    %85 = arith.negf %84 : vector<8x256xf32>
    %86 = math.exp %85 : vector<8x256xf32>
    %cst_36 = arith.constant 1.000000e+00 : f32
    %87 = vector.broadcast %cst_36 : f32 to vector<8x256xf32>
    %88 = arith.addf %87, %86 : vector<8x256xf32>
    %89 = arith.divf %87, %88 : vector<8x256xf32>
    %90 = vector.extract_strided_slice %89 {offsets = [0, 0], sizes = [8, 64], strides = [1, 1]} : vector<8x256xf32> to vector<8x64xf32>
    %91 = vector.extract_strided_slice %89 {offsets = [0, 64], sizes = [8, 64], strides = [1, 1]} : vector<8x256xf32> to vector<8x64xf32>
    %92 = vector.extract_strided_slice %84 {offsets = [0, 128], sizes = [8, 64], strides = [1, 1]} : vector<8x256xf32> to vector<8x64xf32>
    %93 = math.tanh %92 : vector<8x64xf32>
    %94 = vector.extract_strided_slice %89 {offsets = [0, 192], sizes = [8, 64], strides = [1, 1]} : vector<8x256xf32> to vector<8x64xf32>
    %95 = arith.mulf %91, %75 : vector<8x64xf32>
    %96 = arith.mulf %90, %93 : vector<8x64xf32>
    %97 = arith.addf %95, %96 : vector<8x64xf32>
    %98 = math.tanh %97 : vector<8x64xf32>
    %99 = arith.mulf %94, %98 : vector<8x64xf32>
    %100 = vector.extract_strided_slice %99 {offsets = [0, 0], sizes = [8, 32], strides = [1, 1]} : vector<8x64xf32> to vector<8x32xf32>
    %c24_37 = arith.constant 24 : index
    %c0_38 = arith.constant 0 : index
    %101 = vector.load %arg15[%c24_37, %c0_38] : memref<64x64xf32, #tpu.memory_space<vmem>>, vector<8x32xf32>
    tpu.vector_store %arg15[%c24_37, %c0_38], %100 {strides = array<i32>} : memref<64x64xf32, #tpu.memory_space<vmem>>, vector<8x32xf32>,
    %102 = vector.extract_strided_slice %99 {offsets = [0, 32], sizes = [8, 32], strides = [1, 1]} : vector<8x64xf32> to vector<8x32xf32>
    %c32_39 = arith.constant 32 : index
    %c32_40 = arith.constant 32 : index
    %103 = vector.load %arg15[%c32_39, %c32_40] : memref<64x64xf32, #tpu.memory_space<vmem>>, vector<8x32xf32>
    tpu.vector_store %arg15[%c32_39, %c32_40], %102 {strides = array<i32>} : memref<64x64xf32, #tpu.memory_space<vmem>>, vector<8x32xf32>,
    %c32_41 = arith.constant 32 : index
    %c0_42 = arith.constant 0 : index
    %104 = vector.load %arg14[%c32_41, %c0_42] : memref<64x256xf32, #tpu.memory_space<vmem>>, vector<8x256xf32>
    %cst_43 = arith.constant dense<0.000000e+00> : vector<8x256xf32>
    %105 = tpu.matmul %99, %13, %cst_43 {dimension_numbers = #tpu.dot_dimension_numbers<[1], [0], [0], [1], [0, 0, 1, 1], [], []>} : vector<8x64xf32>, vector<64x256xf32>, vector<8x256xf32> -> vector<8x256xf32>
    %106 = arith.addf %104, %105 : vector<8x256xf32>
    %107 = arith.negf %106 : vector<8x256xf32>
    %108 = math.exp %107 : vector<8x256xf32>
    %cst_44 = arith.constant 1.000000e+00 : f32
    %109 = vector.broadcast %cst_44 : f32 to vector<8x256xf32>
    %110 = arith.addf %109, %108 : vector<8x256xf32>
    %111 = arith.divf %109, %110 : vector<8x256xf32>
    %112 = vector.extract_strided_slice %111 {offsets = [0, 0], sizes = [8, 64], strides = [1, 1]} : vector<8x256xf32> to vector<8x64xf32>
    %113 = vector.extract_strided_slice %111 {offsets = [0, 64], sizes = [8, 64], strides = [1, 1]} : vector<8x256xf32> to vector<8x64xf32>
    %114 = vector.extract_strided_slice %106 {offsets = [0, 128], sizes = [8, 64], strides = [1, 1]} : vector<8x256xf32> to vector<8x64xf32>
    %115 = math.tanh %114 : vector<8x64xf32>
    %116 = vector.extract_strided_slice %111 {offsets = [0, 192], sizes = [8, 64], strides = [1, 1]} : vector<8x256xf32> to vector<8x64xf32>
    %117 = arith.mulf %113, %97 : vector<8x64xf32>
    %118 = arith.mulf %112, %115 : vector<8x64xf32>
    %119 = arith.addf %117, %118 : vector<8x64xf32>
    %120 = math.tanh %119 : vector<8x64xf32>
    %121 = arith.mulf %116, %120 : vector<8x64xf32>
    %122 = vector.extract_strided_slice %121 {offsets = [0, 0], sizes = [8, 32], strides = [1, 1]} : vector<8x64xf32> to vector<8x32xf32>
    %c32_45 = arith.constant 32 : index
    %c0_46 = arith.constant 0 : index
    %123 = vector.load %arg15[%c32_45, %c0_46] : memref<64x64xf32, #tpu.memory_space<vmem>>, vector<8x32xf32>
    tpu.vector_store %arg15[%c32_45, %c0_46], %122 {strides = array<i32>} : memref<64x64xf32, #tpu.memory_space<vmem>>, vector<8x32xf32>,
    %124 = vector.extract_strided_slice %121 {offsets = [0, 32], sizes = [8, 32], strides = [1, 1]} : vector<8x64xf32> to vector<8x32xf32>
    %c24_47 = arith.constant 24 : index
    %c32_48 = arith.constant 32 : index
    %125 = vector.load %arg15[%c24_47, %c32_48] : memref<64x64xf32, #tpu.memory_space<vmem>>, vector<8x32xf32>
    tpu.vector_store %arg15[%c24_47, %c32_48], %124 {strides = array<i32>} : memref<64x64xf32, #tpu.memory_space<vmem>>, vector<8x32xf32>,
    %c40_49 = arith.constant 40 : index
    %c0_50 = arith.constant 0 : index
    %126 = vector.load %arg14[%c40_49, %c0_50] : memref<64x256xf32, #tpu.memory_space<vmem>>, vector<8x256xf32>
    %cst_51 = arith.constant dense<0.000000e+00> : vector<8x256xf32>
    %127 = tpu.matmul %121, %13, %cst_51 {dimension_numbers = #tpu.dot_dimension_numbers<[1], [0], [0], [1], [0, 0, 1, 1], [], []>} : vector<8x64xf32>, vector<64x256xf32>, vector<8x256xf32> -> vector<8x256xf32>
    %128 = arith.addf %126, %127 : vector<8x256xf32>
    %129 = arith.negf %128 : vector<8x256xf32>
    %130 = math.exp %129 : vector<8x256xf32>
    %cst_52 = arith.constant 1.000000e+00 : f32
    %131 = vector.broadcast %cst_52 : f32 to vector<8x256xf32>
    %132 = arith.addf %131, %130 : vector<8x256xf32>
    %133 = arith.divf %131, %132 : vector<8x256xf32>
    %134 = vector.extract_strided_slice %133 {offsets = [0, 0], sizes = [8, 64], strides = [1, 1]} : vector<8x256xf32> to vector<8x64xf32>
    %135 = vector.extract_strided_slice %133 {offsets = [0, 64], sizes = [8, 64], strides = [1, 1]} : vector<8x256xf32> to vector<8x64xf32>
    %136 = vector.extract_strided_slice %128 {offsets = [0, 128], sizes = [8, 64], strides = [1, 1]} : vector<8x256xf32> to vector<8x64xf32>
    %137 = math.tanh %136 : vector<8x64xf32>
    %138 = vector.extract_strided_slice %133 {offsets = [0, 192], sizes = [8, 64], strides = [1, 1]} : vector<8x256xf32> to vector<8x64xf32>
    %139 = arith.mulf %135, %119 : vector<8x64xf32>
    %140 = arith.mulf %134, %137 : vector<8x64xf32>
    %141 = arith.addf %139, %140 : vector<8x64xf32>
    %142 = math.tanh %141 : vector<8x64xf32>
    %143 = arith.mulf %138, %142 : vector<8x64xf32>
    %144 = vector.extract_strided_slice %143 {offsets = [0, 0], sizes = [8, 32], strides = [1, 1]} : vector<8x64xf32> to vector<8x32xf32>
    %c40_53 = arith.constant 40 : index
    %c0_54 = arith.constant 0 : index
    %145 = vector.load %arg15[%c40_53, %c0_54] : memref<64x64xf32, #tpu.memory_space<vmem>>, vector<8x32xf32>
    tpu.vector_store %arg15[%c40_53, %c0_54], %144 {strides = array<i32>} : memref<64x64xf32, #tpu.memory_space<vmem>>, vector<8x32xf32>,
    %146 = vector.extract_strided_slice %143 {offsets = [0, 32], sizes = [8, 32], strides = [1, 1]} : vector<8x64xf32> to vector<8x32xf32>
    %c16_55 = arith.constant 16 : index
    %c32_56 = arith.constant 32 : index
    %147 = vector.load %arg15[%c16_55, %c32_56] : memref<64x64xf32, #tpu.memory_space<vmem>>, vector<8x32xf32>
    tpu.vector_store %arg15[%c16_55, %c32_56], %146 {strides = array<i32>} : memref<64x64xf32, #tpu.memory_space<vmem>>, vector<8x32xf32>,
    %c48_57 = arith.constant 48 : index
    %c0_58 = arith.constant 0 : index
    %148 = vector.load %arg14[%c48_57, %c0_58] : memref<64x256xf32, #tpu.memory_space<vmem>>, vector<8x256xf32>
    %cst_59 = arith.constant dense<0.000000e+00> : vector<8x256xf32>
    %149 = tpu.matmul %143, %13, %cst_59 {dimension_numbers = #tpu.dot_dimension_numbers<[1], [0], [0], [1], [0, 0, 1, 1], [], []>} : vector<8x64xf32>, vector<64x256xf32>, vector<8x256xf32> -> vector<8x256xf32>
    %150 = arith.addf %148, %149 : vector<8x256xf32>
    %151 = arith.negf %150 : vector<8x256xf32>
    %152 = math.exp %151 : vector<8x256xf32>
    %cst_60 = arith.constant 1.000000e+00 : f32
    %153 = vector.broadcast %cst_60 : f32 to vector<8x256xf32>
    %154 = arith.addf %153, %152 : vector<8x256xf32>
    %155 = arith.divf %153, %154 : vector<8x256xf32>
    %156 = vector.extract_strided_slice %155 {offsets = [0, 0], sizes = [8, 64], strides = [1, 1]} : vector<8x256xf32> to vector<8x64xf32>
    %157 = vector.extract_strided_slice %155 {offsets = [0, 64], sizes = [8, 64], strides = [1, 1]} : vector<8x256xf32> to vector<8x64xf32>
    %158 = vector.extract_strided_slice %150 {offsets = [0, 128], sizes = [8, 64], strides = [1, 1]} : vector<8x256xf32> to vector<8x64xf32>
    %159 = math.tanh %158 : vector<8x64xf32>
    %160 = vector.extract_strided_slice %155 {offsets = [0, 192], sizes = [8, 64], strides = [1, 1]} : vector<8x256xf32> to vector<8x64xf32>
    %161 = arith.mulf %157, %141 : vector<8x64xf32>
    %162 = arith.mulf %156, %159 : vector<8x64xf32>
    %163 = arith.addf %161, %162 : vector<8x64xf32>
    %164 = math.tanh %163 : vector<8x64xf32>
    %165 = arith.mulf %160, %164 : vector<8x64xf32>
    %166 = vector.extract_strided_slice %165 {offsets = [0, 0], sizes = [8, 32], strides = [1, 1]} : vector<8x64xf32> to vector<8x32xf32>
    %c48_61 = arith.constant 48 : index
    %c0_62 = arith.constant 0 : index
    %167 = vector.load %arg15[%c48_61, %c0_62] : memref<64x64xf32, #tpu.memory_space<vmem>>, vector<8x32xf32>
    tpu.vector_store %arg15[%c48_61, %c0_62], %166 {strides = array<i32>} : memref<64x64xf32, #tpu.memory_space<vmem>>, vector<8x32xf32>,
    %168 = vector.extract_strided_slice %165 {offsets = [0, 32], sizes = [8, 32], strides = [1, 1]} : vector<8x64xf32> to vector<8x32xf32>
    %c8_63 = arith.constant 8 : index
    %c32_64 = arith.constant 32 : index
    %169 = vector.load %arg15[%c8_63, %c32_64] : memref<64x64xf32, #tpu.memory_space<vmem>>, vector<8x32xf32>
    tpu.vector_store %arg15[%c8_63, %c32_64], %168 {strides = array<i32>} : memref<64x64xf32, #tpu.memory_space<vmem>>, vector<8x32xf32>,
    %c56_65 = arith.constant 56 : index
    %c0_66 = arith.constant 0 : index
    %170 = vector.load %arg14[%c56_65, %c0_66] : memref<64x256xf32, #tpu.memory_space<vmem>>, vector<8x256xf32>
    %cst_67 = arith.constant dense<0.000000e+00> : vector<8x256xf32>
    %171 = tpu.matmul %165, %13, %cst_67 {dimension_numbers = #tpu.dot_dimension_numbers<[1], [0], [0], [1], [0, 0, 1, 1], [], []>} : vector<8x64xf32>, vector<64x256xf32>, vector<8x256xf32> -> vector<8x256xf32>
    %172 = arith.addf %170, %171 : vector<8x256xf32>
    %173 = arith.negf %172 : vector<8x256xf32>
    %174 = math.exp %173 : vector<8x256xf32>
    %cst_68 = arith.constant 1.000000e+00 : f32
    %175 = vector.broadcast %cst_68 : f32 to vector<8x256xf32>
    %176 = arith.addf %175, %174 : vector<8x256xf32>
    %177 = arith.divf %175, %176 : vector<8x256xf32>
    %178 = vector.extract_strided_slice %177 {offsets = [0, 0], sizes = [8, 64], strides = [1, 1]} : vector<8x256xf32> to vector<8x64xf32>
    %179 = vector.extract_strided_slice %177 {offsets = [0, 64], sizes = [8, 64], strides = [1, 1]} : vector<8x256xf32> to vector<8x64xf32>
    %180 = vector.extract_strided_slice %172 {offsets = [0, 128], sizes = [8, 64], strides = [1, 1]} : vector<8x256xf32> to vector<8x64xf32>
    %181 = math.tanh %180 : vector<8x64xf32>
    %182 = vector.extract_strided_slice %177 {offsets = [0, 192], sizes = [8, 64], strides = [1, 1]} : vector<8x256xf32> to vector<8x64xf32>
    %183 = arith.mulf %179, %163 : vector<8x64xf32>
    %184 = arith.mulf %178, %181 : vector<8x64xf32>
    %185 = arith.addf %183, %184 : vector<8x64xf32>
    %186 = math.tanh %185 : vector<8x64xf32>
    %187 = arith.mulf %182, %186 : vector<8x64xf32>
    %188 = vector.extract_strided_slice %187 {offsets = [0, 0], sizes = [8, 32], strides = [1, 1]} : vector<8x64xf32> to vector<8x32xf32>
    %c56_69 = arith.constant 56 : index
    %c0_70 = arith.constant 0 : index
    %189 = vector.load %arg15[%c56_69, %c0_70] : memref<64x64xf32, #tpu.memory_space<vmem>>, vector<8x32xf32>
    tpu.vector_store %arg15[%c56_69, %c0_70], %188 {strides = array<i32>} : memref<64x64xf32, #tpu.memory_space<vmem>>, vector<8x32xf32>,
    %190 = vector.extract_strided_slice %187 {offsets = [0, 32], sizes = [8, 32], strides = [1, 1]} : vector<8x64xf32> to vector<8x32xf32>
    %c0_71 = arith.constant 0 : index
    %c32_72 = arith.constant 32 : index
    %191 = vector.load %arg15[%c0_71, %c32_72] : memref<64x64xf32, #tpu.memory_space<vmem>>, vector<8x32xf32>
    tpu.vector_store %arg15[%c0_71, %c32_72], %190 {strides = array<i32>} : memref<64x64xf32, #tpu.memory_space<vmem>>, vector<8x32xf32>,
    %c0_73 = arith.constant 0 : index
    %c0_74 = arith.constant 0 : index
    %192 = vector.load %arg15[%c0_73, %c0_74] : memref<64x64xf32, #tpu.memory_space<vmem>>, vector<64x64xf32>
    %c0_75 = arith.constant 0 : index
    %c0_76 = arith.constant 0 : index
    %193 = vector.load %arg6[%c0_75, %c0_76] : memref<64x64xf32, #tpu.memory_space<vmem>>, vector<64x64xf32>
    %cst_77 = arith.constant dense<0.000000e+00> : vector<64x64xf32>
    %194 = tpu.matmul %192, %193, %cst_77 {dimension_numbers = #tpu.dot_dimension_numbers<[1], [0], [0], [1], [0, 0, 1, 1], [], []>} : vector<64x64xf32>, vector<64x64xf32>, vector<64x64xf32> -> vector<64x64xf32>
    %c0_78 = arith.constant 0 : index
    %c0_79 = arith.constant 0 : index
    %195 = vector.load %arg7[%c0_78, %c0_79] : memref<1x64xf32, #tpu.memory_space<vmem>>, vector<1x64xf32>
    %196 = vector.broadcast %195 : vector<1x64xf32> to vector<64x64xf32>
    %197 = arith.addf %194, %196 : vector<64x64xf32>
    %cst_80 = arith.constant 0.000000e+00 : f32
    %198 = vector.broadcast %cst_80 : f32 to vector<64x64xf32>
    %199 = arith.maximumf %197, %198 : vector<64x64xf32>
    %c0_81 = arith.constant 0 : index
    %c0_82 = arith.constant 0 : index
    %200 = vector.load %arg8[%c0_81, %c0_82] : memref<64x1xf32, #tpu.memory_space<vmem>>, vector<64x1xf32>
    %cst_83 = arith.constant dense<0.000000e+00> : vector<64x1xf32>
    %201 = tpu.matmul %199, %200, %cst_83 {dimension_numbers = #tpu.dot_dimension_numbers<[1], [0], [0], [1], [0, 0, 1, 1], [], []>} : vector<64x64xf32>, vector<64x1xf32>, vector<64x1xf32> -> vector<64x1xf32>
    %c0_84 = arith.constant 0 : index
    %c0_85 = arith.constant 0 : index
    %202 = vector.load %arg9[%c0_84, %c0_85] : memref<1x1xf32, #tpu.memory_space<vmem>>, vector<1x1xf32>
    %203 = vector.broadcast %202 : vector<1x1xf32> to vector<64x1xf32>
    %204 = arith.addf %201, %203 : vector<64x1xf32>
    %205 = vector.shape_cast %204 : vector<64x1xf32> to vector<8x8x1xf32>
    %cst_86 = arith.constant dense<0xFF800000> : vector<8x1xf32>
    %206 = vector.multi_reduction <maximumf>, %205, %cst_86 [0] : vector<8x8x1xf32> to vector<8x1xf32>
    %cst_87 = arith.constant 0xFF800000 : f32
    %207 = vector.broadcast %cst_87 : f32 to vector<8x1xf32>
    %208 = arith.maximumf %207, %206 : vector<8x1xf32>
    %209 = vector.shape_cast %208 : vector<8x1xf32> to vector<1x8x1xf32>
    %210 = vector.broadcast %209 : vector<1x8x1xf32> to vector<8x8x1xf32>
    %211 = arith.subf %205, %210 : vector<8x8x1xf32>
    %212 = math.exp %211 : vector<8x8x1xf32>
    %cst_88 = arith.constant dense<0.000000e+00> : vector<8x1xf32>
    %213 = vector.multi_reduction <add>, %212, %cst_88 [0] : vector<8x8x1xf32> to vector<8x1xf32>
    %214 = vector.shape_cast %213 : vector<8x1xf32> to vector<1x8x1xf32>
    %215 = vector.broadcast %214 : vector<1x8x1xf32> to vector<8x8x1xf32>
    %216 = arith.divf %212, %215 : vector<8x8x1xf32>
    %217 = vector.shape_cast %192 : vector<64x64xf32> to vector<8x8x64xf32>
    %218 = vector.broadcast %216 : vector<8x8x1xf32> to vector<8x8x64xf32>
    %219 = arith.mulf %217, %218 : vector<8x8x64xf32>
    %cst_89 = arith.constant dense<0.000000e+00> : vector<8x64xf32>
    %220 = vector.multi_reduction <add>, %219, %cst_89 [0] : vector<8x8x64xf32> to vector<8x64xf32>
    %cst_90 = arith.constant dense<0.000000e+00> : vector<8x64xf32>
    %221 = vector.multi_reduction <add>, %217, %cst_90 [0] : vector<8x8x64xf32> to vector<8x64xf32>
    %c0_91 = arith.constant 0 : index
    %c0_92 = arith.constant 0 : index
    %222 = vector.load %arg10[%c0_91, %c0_92] : memref<64x5xf32, #tpu.memory_space<vmem>>, vector<64x5xf32>
    %cst_93 = arith.constant dense<0.000000e+00> : vector<8x5xf32>
    %223 = tpu.matmul %220, %222, %cst_93 {dimension_numbers = #tpu.dot_dimension_numbers<[1], [0], [0], [1], [0, 0, 1, 1], [], []>} : vector<8x64xf32>, vector<64x5xf32>, vector<8x5xf32> -> vector<8x5xf32>
    %c0_94 = arith.constant 0 : index
    %c0_95 = arith.constant 0 : index
    %224 = vector.load %arg11[%c0_94, %c0_95] : memref<64x5xf32, #tpu.memory_space<vmem>>, vector<64x5xf32>
    %cst_96 = arith.constant dense<0.000000e+00> : vector<8x5xf32>
    %225 = tpu.matmul %221, %224, %cst_96 {dimension_numbers = #tpu.dot_dimension_numbers<[1], [0], [0], [1], [0, 0, 1, 1], [], []>} : vector<8x64xf32>, vector<64x5xf32>, vector<8x5xf32> -> vector<8x5xf32>
    %226 = arith.addf %223, %225 : vector<8x5xf32>
    %c0_97 = arith.constant 0 : index
    %c0_98 = arith.constant 0 : index
    %227 = vector.load %arg12[%c0_97, %c0_98] : memref<1x5xf32, #tpu.memory_space<vmem>>, vector<1x5xf32>
    %228 = vector.broadcast %227 : vector<1x5xf32> to vector<8x5xf32>
    %229 = arith.addf %226, %228 : vector<8x5xf32>
    %c0_99 = arith.constant 0 : index
    %c0_100 = arith.constant 0 : index
    %230 = vector.load %arg13[%c0_99, %c0_100] : memref<8x5xf32, #tpu.memory_space<vmem>>, vector<8x5xf32>
    tpu.vector_store %arg13[%c0_99, %c0_100], %229 {strides = array<i32>} : memref<8x5xf32, #tpu.memory_space<vmem>>, vector<8x5xf32>,
    return
  }
}

</mosaic_0001>

<llo_original>
// kernel: tpu_custom_call.1
$region0: #{tpu_custom_call.1}
  #allocation0 [shape = 'u32[]', space=smem, size = 0x4, offset = 0x4, fixed_abs, tag = 'smem constant byte address 0x4 - core index']
  #allocation1 [shape = 'u32[144,128]{1,0:T(1,128)}', space=vmem, size = 0x12000, scoped, tag = 'internal scratch']
  #allocation2 [shape = 'f32[64,256]{1,0:T(8,128)}', space=vmem, size = 0x10000, scoped, tag = 'scratch operand']
  #allocation3 [shape = 'f32[64,64]{1,0:T(8,128)}', space=vmem, size = 0x8000, scoped, tag = 'scratch operand']
  #allocation4 [shape = 'f32[1,1]{1,0:T(1,128)S(1)}', space=vmem, size = 0x200, scoped, tag = 'scoped memory for tpu_custom_call.1']
  %s0 = inlined_call_operand.vmem [shape: f32[64,32], index: 0, kind: input, shape index: {}]
  %s1 = inlined_call_operand.vmem [shape: f32[32,32], index: 1, kind: input, shape index: {}]
  %s2 = inlined_call_operand.vmem [shape: f32[1,32], index: 2, kind: input, shape index: {}]
  %s3 = inlined_call_operand.vmem [shape: f32[32,256], index: 3, kind: input, shape index: {}]
  %s4 = inlined_call_operand.vmem [shape: f32[64,256], index: 4, kind: input, shape index: {}]
  %s5 = inlined_call_operand.vmem [shape: f32[1,256], index: 5, kind: input, shape index: {}]
  %s6 = inlined_call_operand.vmem [shape: f32[64,64], index: 6, kind: input, shape index: {}]
  %s7 = inlined_call_operand.vmem [shape: f32[1,64], index: 7, kind: input, shape index: {}]
  %s8 = inlined_call_operand.vmem [shape: f32[64,1], index: 8, kind: input, shape index: {}]
  %s9 = inlined_call_operand.<no memory space> [shape: f32[1,1], index: 9, kind: input, shape index: {}]
  %s10 = inlined_call_operand.vmem [shape: f32[64,5], index: 10, kind: input, shape index: {}]
  %s11 = inlined_call_operand.vmem [shape: f32[64,5], index: 11, kind: input, shape index: {}]
  %s12 = inlined_call_operand.vmem [shape: f32[1,5], index: 12, kind: input, shape index: {}]
  %s13 = inlined_call_operand.hbm [shape: f32[8,5], index: 13, kind: output, shape index: {}]
  %s14 = sld [smem:[#allocation0]]
  $region62: #{tpu_custom_call.1} parent=0
    _
  %s16 = ssub.s32 1, %s14
  %s17 = scalar_select 0, %s16, %s14
  %v18 = vstv %s9
  %19 = vst [vmem:[#allocation4] sm:$0x1] %v18
  $region1: #{tpu_custom_call.1} parent=0
    #allocation5 [shape = 'u8[4096]{0}', space=vmem, size = 0x1000, scoped, tag = 'output window, operand 0, single buffered']
    #allocation6 [shape = 's32[1]{0}', space=sflag, size = 0x4, scoped, tag = 'scoped memory for tpu_custom_call.1']
    %20 = vsyncpa [#allocation6], 0
    // Predicated region
    $region2: #{tpu_custom_call.1} parent=1 // pred_check
      _
    $region3: #{tpu_custom_call.1} parent=1 // pred_check_branch
      %22 = sbr.rel (0) target = $region5
    $region4: #{tpu_custom_call.1} parent=1 // pred_region
      _
    $region5: #{tpu_custom_call.1} parent=1 // pred_fallthru
      _
    // Predicated region
    $region6: #{tpu_custom_call.1} parent=1 // pred_check
      _
    $region7: #{tpu_custom_call.1} parent=1 // pred_check_branch
      %24 = sbr.rel (0) target = $region9
    $region8: #{tpu_custom_call.1} parent=1 // pred_region
      _
    $region9: #{tpu_custom_call.1} parent=1 // pred_fallthru
      _
    // Predicated region
    $region10: #{tpu_custom_call.1} parent=1 // pred_check
      _
    $region11: #{tpu_custom_call.1} parent=1 // pred_check_branch
      %26 = sbr.rel (0) target = $region13
    $region12: #{tpu_custom_call.1} parent=1 // pred_region
      _
    $region13: #{tpu_custom_call.1} parent=1 // pred_fallthru
      _
    // Predicated region
    $region14: #{tpu_custom_call.1} parent=1 // pred_check
      _
    $region15: #{tpu_custom_call.1} parent=1 // pred_check_branch
      %28 = sbr.rel (0) target = $region17
    $region16: #{tpu_custom_call.1} parent=1 // pred_region
      _
    $region17: #{tpu_custom_call.1} parent=1 // pred_fallthru
      _
    // Predicated region
    $region18: #{tpu_custom_call.1} parent=1 // pred_check
      _
    $region19: #{tpu_custom_call.1} parent=1 // pred_check_branch
      %30 = sbr.rel (0) target = $region21
    $region20: #{tpu_custom_call.1} parent=1 // pred_region
      _
    $region21: #{tpu_custom_call.1} parent=1 // pred_fallthru
      _
    // Predicated region
    $region22: #{tpu_custom_call.1} parent=1 // pred_check
      _
    $region23: #{tpu_custom_call.1} parent=1 // pred_check_branch
      %32 = sbr.rel (0) target = $region25
    $region24: #{tpu_custom_call.1} parent=1 // pred_region
      _
    $region25: #{tpu_custom_call.1} parent=1 // pred_fallthru
      _
    // Predicated region
    $region26: #{tpu_custom_call.1} parent=1 // pred_check
      _
    $region27: #{tpu_custom_call.1} parent=1 // pred_check_branch
      %34 = sbr.rel (0) target = $region29
    $region28: #{tpu_custom_call.1} parent=1 // pred_region
      _
    $region29: #{tpu_custom_call.1} parent=1 // pred_fallthru
      _
    // Predicated region
    $region30: #{tpu_custom_call.1} parent=1 // pred_check
      _
    $region31: #{tpu_custom_call.1} parent=1 // pred_check_branch
      %36 = sbr.rel (0) target = $region33
    $region32: #{tpu_custom_call.1} parent=1 // pred_region
      _
    $region33: #{tpu_custom_call.1} parent=1 // pred_fallthru
      _
    // Predicated region
    $region34: #{tpu_custom_call.1} parent=1 // pred_check
      _
    $region35: #{tpu_custom_call.1} parent=1 // pred_check_branch
      %38 = sbr.rel (0) target = $region37
    $region36: #{tpu_custom_call.1} parent=1 // pred_region
      _
    $region37: #{tpu_custom_call.1} parent=1 // pred_fallthru
      _
    // Predicated region
    $region38: #{tpu_custom_call.1} parent=1 // pred_check
      _
    $region39: #{tpu_custom_call.1} parent=1 // pred_check_branch
      %40 = sbr.rel (0) target = $region41
    $region40: #{tpu_custom_call.1} parent=1 // pred_region
      _
    $region41: #{tpu_custom_call.1} parent=1 // pred_fallthru
      _
    // Predicated region
    $region42: #{tpu_custom_call.1} parent=1 // pred_check
      _
    $region43: #{tpu_custom_call.1} parent=1 // pred_check_branch
      %42 = sbr.rel (0) target = $region45
    $region44: #{tpu_custom_call.1} parent=1 // pred_region
      _
    $region45: #{tpu_custom_call.1} parent=1 // pred_fallthru
      _
    // Predicated region
    $region46: #{tpu_custom_call.1} parent=1 // pred_check
      _
    $region47: #{tpu_custom_call.1} parent=1 // pred_check_branch
      %44 = sbr.rel (0) target = $region49
    $region48: #{tpu_custom_call.1} parent=1 // pred_region
      _
    $region49: #{tpu_custom_call.1} parent=1 // pred_fallthru
      _
    // Predicated region
    $region50: #{tpu_custom_call.1} parent=1 // pred_check
      _
    $region51: #{tpu_custom_call.1} parent=1 // pred_check_branch
      %46 = sbr.rel (0) target = $region53
    $region52: #{tpu_custom_call.1} parent=1 // pred_region
      _
    $region53: #{tpu_custom_call.1} parent=1 // pred_fallthru
      _
    %v47 = vld [vmem:[%s0] sm:$0xff]
    %v48 = vld [vmem:[%s0 + $0x8] sm:$0xff]
    %v49 = vld [vmem:[%s0 + $0x10] sm:$0xff]
    %v50 = vld [vmem:[%s0 + $0x18] sm:$0xff]
    %v51 = vld [vmem:[%s0 + $0x20] sm:$0xff]
    %v52 = vld [vmem:[%s0 + $0x28] sm:$0xff]
    %v53 = vld [vmem:[%s0 + $0x30] sm:$0xff]
    %v54 = vld [vmem:[%s0 + $0x38] sm:$0xff]
    %v55 = vld [vmem:[%s1] sm:$0xff]
    %v56 = vld [vmem:[%s1 + $0x8] sm:$0xff]
    %v57 = vld [vmem:[%s1 + $0x10] sm:$0xff]
    %v58 = vld [vmem:[%s1 + $0x18] sm:$0xff]
    %v59 = vld [vmem:[%s2] sm:$0x1]
    %v61 = vlaneseq
    %v62 = vshrl.u32 %v61, 7
    %v63 = vsub.s32 0, %v62
    %v64 = vrot.slane %v59, %v63
    %vm66 = vcmask 261120
    %v68 = vsel %vm66, %v47, 0
    %v71 = vsel %vm66, %v48, 0
    %v74 = vsel %vm66, %v49, 0
    %v77 = vsel %vm66, %v50, 0
    %v80 = vsel %vm66, %v51, 0
    %v83 = vsel %vm66, %v52, 0
    %v86 = vsel %vm66, %v53, 0
    %v89 = vsel %vm66, %v54, 0
    %91 = vmatprep.subr.mxu0 0.0
    %92 = vmatpush1.msra.mxu0 %v55
    %93 = vmatprep.subr.mxu0 0.0
    %94 = vmatpush1.msra.mxu0 %v56
    %95 = vmatprep.subr.mxu0 0.0
    %96 = vmatpush1.msra.mxu0 %v57
    %97 = vmatprep.subr.mxu0 0.0
    %98 = vmatpush1.msra.mxu0 %v58
    %99 = vmatprep.subr.mxu0 0.0
    %100 = vmatpush1.msra.mxu0 0.0
    %101 = vmatprep.subr.mxu0 0.0
    %102 = vmatpush1.msra.mxu0 0.0
    %103 = vmatprep.subr.mxu0 0.0
    %104 = vmatpush1.msra.mxu0 0.0
    %105 = vmatprep.subr.mxu0 0.0
    %106 = vmatpush1.msra.mxu0 0.0
    %107 = vmatprep.subr.mxu0 0.0
    %108 = vmatpush1.msra.mxu0 0.0
    %109 = vmatprep.subr.mxu0 0.0
    %110 = vmatpush1.msra.mxu0 0.0
    %111 = vmatprep.subr.mxu0 0.0
    %112 = vmatpush1.msra.mxu0 0.0
    %113 = vmatprep.subr.mxu0 0.0
    %114 = vmatpush1.msra.mxu0 0.0
    %115 = vmatprep.subr.mxu0 0.0
    %116 = vmatpush1.msra.mxu0 0.0
    %117 = vmatprep.subr.mxu0 0.0
    %118 = vmatpush1.msra.mxu0 0.0
    %119 = vmatprep.subr.mxu0 0.0
    %120 = vmatpush1.msra.mxu0 0.0
    %121 = vmatprep.subr.mxu0 0.0
    %122 = vmatpush1.msra.mxu0 0.0
    %123 = vmatprep.subr.mxu0 0.0
    %124 = vmatpush1.msra.mxu0 0.0
    %125 = vmatprep.subr.mxu0 0.0
    %126 = vmatpush1.msra.mxu0 0.0
    %127 = vmatprep.subr.mxu0 0.0
    %128 = vmatpush1.msra.mxu0 0.0
    %129 = vmatprep.subr.mxu0 0.0
    %130 = vmatpush1.msra.mxu0 0.0
    %131 = vmatprep.subr.mxu0 0.0
    %132 = vmatpush1.msra.mxu0 0.0
    %133 = vmatprep.subr.mxu0 0.0
    %134 = vmatpush1.msra.mxu0 0.0
    %135 = vmatprep.subr.mxu0 0.0
    %136 = vmatpush1.msra.mxu0 0.0
    %137 = vmatprep.subr.mxu0 0.0
    %138 = vmatpush1.msra.mxu0 0.0
    %139 = vmatprep.subr.mxu0 0.0
    %140 = vmatpush1.msra.mxu0 0.0
    %141 = vmatprep.subr.mxu0 0.0
    %142 = vmatpush1.msra.mxu0 0.0
    %143 = vmatprep.subr.mxu0 0.0
    %144 = vmatpush1.msra.mxu0 0.0
    %145 = vmatprep.subr.mxu0 0.0
    %146 = vmatpush1.msra.mxu0 0.0
    %147 = vmatprep.subr.mxu0 0.0
    %148 = vmatpush1.msra.mxu0 0.0
    %149 = vmatprep.subr.mxu0 0.0
    %150 = vmatpush1.msra.mxu0 0.0
    %151 = vmatprep.subr.mxu0 0.0
    %152 = vmatpush1.msra.mxu0 0.0
    %153 = vmatprep.subr.mxu0 0.0
    %154 = vmatpush1.msra.mxu0 0.0
    %155 = vmatprep.mubr.f32.mxu0 0.0
    %156 = vmatmul.mubr.f32.gmra.mrb[0].mxu0 %v68
    %v157 = vpop.f32.mrb[0].mxu0
    %v158 = vadd.f32 %v64, %v157
    %v159 = vpop.f32.mrb[0].mxu0
    %160 = vmatprep.mubr.f32.mxu0 0.0
    %161 = vmatmul.mubr.f32.gmra.mrb[0].mxu0 %v71
    %v162 = vpop.f32.mrb[0].mxu0
    %v163 = vadd.f32 %v64, %v162
    %v164 = vpop.f32.mrb[0].mxu0
    %165 = vmatprep.mubr.f32.mxu0 0.0
    %166 = vmatmul.mubr.f32.gmra.mrb[0].mxu0 %v74
    %v167 = vpop.f32.mrb[0].mxu0
    %v168 = vadd.f32 %v64, %v167
    %v169 = vpop.f32.mrb[0].mxu0
    %170 = vmatprep.mubr.f32.mxu0 0.0
    %171 = vmatmul.mubr.f32.gmra.mrb[0].mxu0 %v77
    %v172 = vpop.f32.mrb[0].mxu0
    %v173 = vadd.f32 %v64, %v172
    %v174 = vpop.f32.mrb[0].mxu0
    %175 = vmatprep.mubr.f32.mxu0 0.0
    %176 = vmatmul.mubr.f32.gmra.mrb[0].mxu0 %v80
    %v177 = vpop.f32.mrb[0].mxu0
    %v178 = vadd.f32 %v64, %v177
    %v179 = vpop.f32.mrb[0].mxu0
    %180 = vmatprep.mubr.f32.mxu0 0.0
    %181 = vmatmul.mubr.f32.gmra.mrb[0].mxu0 %v83
    %v182 = vpop.f32.mrb[0].mxu0
    %v183 = vadd.f32 %v64, %v182
    %v184 = vpop.f32.mrb[0].mxu0
    %185 = vmatprep.mubr.f32.mxu0 0.0
    %186 = vmatmul.mubr.f32.gmra.mrb[0].mxu0 %v86
    %v187 = vpop.f32.mrb[0].mxu0
    %v188 = vadd.f32 %v64, %v187
    %v189 = vpop.f32.mrb[0].mxu0
    %190 = vmatprep.mubr.f32.mxu0 0.0
    %191 = vmatmul.mubr.f32.gmra.mrb[0].mxu0 %v89
    %v192 = vpop.f32.mrb[0].mxu0
    %v193 = vadd.f32 %v64, %v192
    %v194 = vpop.f32.mrb[0].mxu0
    %195 = vdwg.mxu0
    %v196 = vtanh.pop %v158
    %v197 = vtanh.pop %v163
    %v198 = vtanh.pop %v168
    %v199 = vtanh.pop %v173
    %v200 = vtanh.pop %v178
    %v201 = vtanh.pop %v183
    %v202 = vtanh.pop %v188
    %v203 = vtanh.pop %v193
    %v204 = vld [vmem:[%s3] sm:$0xff]
    %v205 = vld [vmem:[%s3 + $0x8] sm:$0xff]
    %v206 = vld [vmem:[%s3 + $0x10] sm:$0xff]
    %v207 = vld [vmem:[%s3 + $0x18] sm:$0xff]
    %v208 = vld [vmem:[%s3 + $0x20] sm:$0xff]
    %v209 = vld [vmem:[%s3 + $0x28] sm:$0xff]
    %v210 = vld [vmem:[%s3 + $0x30] sm:$0xff]
    %v211 = vld [vmem:[%s3 + $0x38] sm:$0xff]
    %v212 = vld [vmem:[%s5] sm:$0x3]
    %v214 = vlaneseq
    %v215 = vshrl.u32 %v214, 7
    %v216 = vsub.s32 0, %v215
    %v217 = vrot.slane %v212, %v216
    %v218 = vlaneseq
    %v219 = vshrl.u32 %v218, 7
    %v220 = vsub.s32 1, %v219
    %v221 = vrot.slane %v212, %v220
    %v225 = vsel %vm66, %v196, 0
    %v228 = vsel %vm66, %v197, 0
    %v231 = vsel %vm66, %v198, 0
    %v234 = vsel %vm66, %v199, 0
    %v237 = vsel %vm66, %v200, 0
    %v240 = vsel %vm66, %v201, 0
    %v243 = vsel %vm66, %v202, 0
    %v246 = vsel %vm66, %v203, 0
    %248 = vmatprep.subr.mxu0 %v205
    %249 = vmatpush1.msra.mxu0 %v204
    %250 = vmatprep.subr.mxu0 %v207
    %251 = vmatpush1.msra.mxu0 %v206
    %252 = vmatprep.subr.mxu0 %v209
    %253 = vmatpush1.msra.mxu0 %v208
    %254 = vmatprep.subr.mxu0 %v211
    %255 = vmatpush1.msra.mxu0 %v210
    %256 = vmatprep.subr.mxu0 0.0
    %257 = vmatpush1.msra.mxu0 0.0
    %258 = vmatprep.subr.mxu0 0.0
    %259 = vmatpush1.msra.mxu0 0.0
    %260 = vmatprep.subr.mxu0 0.0
    %261 = vmatpush1.msra.mxu0 0.0
    %262 = vmatprep.subr.mxu0 0.0
    %263 = vmatpush1.msra.mxu0 0.0
    %264 = vmatprep.subr.mxu0 0.0
    %265 = vmatpush1.msra.mxu0 0.0
    %266 = vmatprep.subr.mxu0 0.0
    %267 = vmatpush1.msra.mxu0 0.0
    %268 = vmatprep.subr.mxu0 0.0
    %269 = vmatpush1.msra.mxu0 0.0
    %270 = vmatprep.subr.mxu0 0.0
    %271 = vmatpush1.msra.mxu0 0.0
    %272 = vmatprep.subr.mxu0 0.0
    %273 = vmatpush1.msra.mxu0 0.0
    %274 = vmatprep.subr.mxu0 0.0
    %275 = vmatpush1.msra.mxu0 0.0
    %276 = vmatprep.subr.mxu0 0.0
    %277 = vmatpush1.msra.mxu0 0.0
    %278 = vmatprep.subr.mxu0 0.0
    %279 = vmatpush1.msra.mxu0 0.0
    %280 = vmatprep.subr.mxu0 0.0
    %281 = vmatpush1.msra.mxu0 0.0
    %282 = vmatprep.subr.mxu0 0.0
    %283 = vmatpush1.msra.mxu0 0.0
    %284 = vmatprep.subr.mxu0 0.0
    %285 = vmatpush1.msra.mxu0 0.0
    %286 = vmatprep.subr.mxu0 0.0
    %287 = vmatpush1.msra.mxu0 0.0
    %288 = vmatprep.subr.mxu0 0.0
    %289 = vmatpush1.msra.mxu0 0.0
    %290 = vmatprep.subr.mxu0 0.0
    %291 = vmatpush1.msra.mxu0 0.0
    %292 = vmatprep.subr.mxu0 0.0
    %293 = vmatpush1.msra.mxu0 0.0
    %294 = vmatprep.subr.mxu0 0.0
    %295 = vmatpush1.msra.mxu0 0.0
    %296 = vmatprep.subr.mxu0 0.0
    %297 = vmatpush1.msra.mxu0 0.0
    %298 = vmatprep.subr.mxu0 0.0
    %299 = vmatpush1.msra.mxu0 0.0
    %300 = vmatprep.subr.mxu0 0.0
    %301 = vmatpush1.msra.mxu0 0.0
    %302 = vmatprep.subr.mxu0 0.0
    %303 = vmatpush1.msra.mxu0 0.0
    %304 = vmatprep.subr.mxu0 0.0
    %305 = vmatpush1.msra.mxu0 0.0
    %306 = vmatprep.subr.mxu0 0.0
    %307 = vmatpush1.msra.mxu0 0.0
    %308 = vmatprep.subr.mxu0 0.0
    %309 = vmatpush1.msra.mxu0 0.0
    %310 = vmatprep.subr.mxu0 0.0
    %311 = vmatpush1.msra.mxu0 0.0
    %312 = vmatprep.mubr.f32.mxu0 0.0
    %313 = vmatmul.mubr.f32.gmra.mrb[0].mxu0 %v225
    %v314 = vpop.f32.mrb[0].mxu0
    %v315 = vadd.f32 %v217, %v314
    %v316 = vpop.f32.mrb[0].mxu0
    %v317 = vadd.f32 %v221, %v316
    %318 = vmatprep.mubr.f32.mxu0 0.0
    %319 = vmatmul.mubr.f32.gmra.mrb[0].mxu0 %v228
    %v320 = vpop.f32.mrb[0].mxu0
    %v321 = vadd.f32 %v217, %v320
    %v322 = vpop.f32.mrb[0].mxu0
    %v323 = vadd.f32 %v221, %v322
    %324 = vmatprep.mubr.f32.mxu0 0.0
    %325 = vmatmul.mubr.f32.gmra.mrb[0].mxu0 %v231
    %v326 = vpop.f32.mrb[0].mxu0
    %v327 = vadd.f32 %v217, %v326
    %v328 = vpop.f32.mrb[0].mxu0
    %v329 = vadd.f32 %v221, %v328
    %330 = vmatprep.mubr.f32.mxu0 0.0
    %331 = vmatmul.mubr.f32.gmra.mrb[0].mxu0 %v234
    %v332 = vpop.f32.mrb[0].mxu0
    %v333 = vadd.f32 %v217, %v332
    %v334 = vpop.f32.mrb[0].mxu0
    %v335 = vadd.f32 %v221, %v334
    %336 = vmatprep.mubr.f32.mxu0 0.0
    %337 = vmatmul.mubr.f32.gmra.mrb[0].mxu0 %v237
    %v338 = vpop.f32.mrb[0].mxu0
    %v339 = vadd.f32 %v217, %v338
    %v340 = vpop.f32.mrb[0].mxu0
    %v341 = vadd.f32 %v221, %v340
    %342 = vmatprep.mubr.f32.mxu0 0.0
    %343 = vmatmul.mubr.f32.gmra.mrb[0].mxu0 %v240
    %v344 = vpop.f32.mrb[0].mxu0
    %v345 = vadd.f32 %v217, %v344
    %v346 = vpop.f32.mrb[0].mxu0
    %v347 = vadd.f32 %v221, %v346
    %348 = vmatprep.mubr.f32.mxu0 0.0
    %349 = vmatmul.mubr.f32.gmra.mrb[0].mxu0 %v243
    %v350 = vpop.f32.mrb[0].mxu0
    %v351 = vadd.f32 %v217, %v350
    %v352 = vpop.f32.mrb[0].mxu0
    %v353 = vadd.f32 %v221, %v352
    %354 = vmatprep.mubr.f32.mxu0 0.0
    %355 = vmatmul.mubr.f32.gmra.mrb[0].mxu0 %v246
    %v356 = vpop.f32.mrb[0].mxu0
    %v357 = vadd.f32 %v217, %v356
    %v358 = vpop.f32.mrb[0].mxu0
    %v359 = vadd.f32 %v221, %v358
    %360 = vdwg.mxu0
    %361 = vst [vmem:[#allocation2] sm:$0xff] %v315
    %362 = vst [vmem:[#allocation2 + $0x8] sm:$0xff] %v317
    %363 = vst [vmem:[#allocation2 + $0x10] sm:$0xff] %v321
    %364 = vst [vmem:[#allocation2 + $0x18] sm:$0xff] %v323
    %365 = vst [vmem:[#allocation2 + $0x20] sm:$0xff] %v327
    %366 = vst [vmem:[#allocation2 + $0x28] sm:$0xff] %v329
    %367 = vst [vmem:[#allocation2 + $0x30] sm:$0xff] %v333
    %368 = vst [vmem:[#allocation2 + $0x38] sm:$0xff] %v335
    %369 = vst [vmem:[#allocation2 + $0x40] sm:$0xff] %v339
    %370 = vst [vmem:[#allocation2 + $0x48] sm:$0xff] %v341
    %371 = vst [vmem:[#allocation2 + $0x50] sm:$0xff] %v345
    %372 = vst [vmem:[#allocation2 + $0x58] sm:$0xff] %v347
    %373 = vst [vmem:[#allocation2 + $0x60] sm:$0xff] %v351
    %374 = vst [vmem:[#allocation2 + $0x68] sm:$0xff] %v353
    %375 = vst [vmem:[#allocation2 + $0x70] sm:$0xff] %v357
    %376 = vst [vmem:[#allocation2 + $0x78] sm:$0xff] %v359
    %v377 = vld [vmem:[%s4] sm:$0xff]
    %v378 = vld [vmem:[%s4 + $0x8] sm:$0xff]
    %v379 = vld [vmem:[%s4 + $0x10] sm:$0xff]
    %v380 = vld [vmem:[%s4 + $0x18] sm:$0xff]
    %v381 = vld [vmem:[%s4 + $0x20] sm:$0xff]
    %v382 = vld [vmem:[%s4 + $0x28] sm:$0xff]
    %v383 = vld [vmem:[%s4 + $0x30] sm:$0xff]
    %v384 = vld [vmem:[%s4 + $0x38] sm:$0xff]
    %v385 = vld [vmem:[%s4 + $0x40] sm:$0xff]
    %v386 = vld [vmem:[%s4 + $0x48] sm:$0xff]
    %v387 = vld [vmem:[%s4 + $0x50] sm:$0xff]
    %v388 = vld [vmem:[%s4 + $0x58] sm:$0xff]
    %v389 = vld [vmem:[%s4 + $0x60] sm:$0xff]
    %v390 = vld [vmem:[%s4 + $0x68] sm:$0xff]
    %v391 = vld [vmem:[%s4 + $0x70] sm:$0xff]
    %v392 = vld [vmem:[%s4 + $0x78] sm:$0xff]
    %v393 = vld [vmem:[#allocation2] sm:$0xff]
    %v394 = vld [vmem:[#allocation2 + $0x8] sm:$0xff]
    %vm395 = vcmask 523264
    %v397 = vsel %vm395, 0.0, 0
    %399 = vmatprep.subr.mxu0 %v378
    %400 = vmatpush1.msra.mxu0 %v377
    %401 = vmatprep.subr.mxu0 %v380
    %402 = vmatpush1.msra.mxu0 %v379
    %403 = vmatprep.subr.mxu0 %v382
    %404 = vmatpush1.msra.mxu0 %v381
    %405 = vmatprep.subr.mxu0 %v384
    %406 = vmatpush1.msra.mxu0 %v383
    %407 = vmatprep.subr.mxu0 %v386
    %408 = vmatpush1.msra.mxu0 %v385
    %409 = vmatprep.subr.mxu0 %v388
    %410 = vmatpush1.msra.mxu0 %v387
    %411 = vmatprep.subr.mxu0 %v390
    %412 = vmatpush1.msra.mxu0 %v389
    %413 = vmatprep.subr.mxu0 %v392
    %414 = vmatpush1.msra.mxu0 %v391
    %415 = vmatprep.subr.mxu0 0.0
    %416 = vmatpush1.msra.mxu0 0.0
    %417 = vmatprep.subr.mxu0 0.0
    %418 = vmatpush1.msra.mxu0 0.0
    %419 = vmatprep.subr.mxu0 0.0
    %420 = vmatpush1.msra.mxu0 0.0
    %421 = vmatprep.subr.mxu0 0.0
    %422 = vmatpush1.msra.mxu0 0.0
    %423 = vmatprep.subr.mxu0 0.0
    %424 = vmatpush1.msra.mxu0 0.0
    %425 = vmatprep.subr.mxu0 0.0
    %426 = vmatpush1.msra.mxu0 0.0
    %427 = vmatprep.subr.mxu0 0.0
    %428 = vmatpush1.msra.mxu0 0.0
    %429 = vmatprep.subr.mxu0 0.0
    %430 = vmatpush1.msra.mxu0 0.0
    %431 = vmatprep.subr.mxu0 0.0
    %432 = vmatpush1.msra.mxu0 0.0
    %433 = vmatprep.subr.mxu0 0.0
    %434 = vmatpush1.msra.mxu0 0.0
    %435 = vmatprep.subr.mxu0 0.0
    %436 = vmatpush1.msra.mxu0 0.0
    %437 = vmatprep.subr.mxu0 0.0
    %438 = vmatpush1.msra.mxu0 0.0
    %439 = vmatprep.subr.mxu0 0.0
    %440 = vmatpush1.msra.mxu0 0.0
    %441 = vmatprep.subr.mxu0 0.0
    %442 = vmatpush1.msra.mxu0 0.0
    %443 = vmatprep.subr.mxu0 0.0
    %444 = vmatpush1.msra.mxu0 0.0
    %445 = vmatprep.subr.mxu0 0.0
    %446 = vmatpush1.msra.mxu0 0.0
    %447 = vmatprep.subr.mxu0 0.0
    %448 = vmatpush1.msra.mxu0 0.0
    %449 = vmatprep.subr.mxu0 0.0
    %450 = vmatpush1.msra.mxu0 0.0
    %451 = vmatprep.subr.mxu0 0.0
    %452 = vmatpush1.msra.mxu0 0.0
    %453 = vmatprep.subr.mxu0 0.0
    %454 = vmatpush1.msra.mxu0 0.0
    %455 = vmatprep.subr.mxu0 0.0
    %456 = vmatpush1.msra.mxu0 0.0
    %457 = vmatprep.subr.mxu0 0.0
    %458 = vmatpush1.msra.mxu0 0.0
    %459 = vmatprep.subr.mxu0 0.0
    %460 = vmatpush1.msra.mxu0 0.0
    %461 = vmatprep.subr.mxu0 0.0
    %462 = vmatpush1.msra.mxu0 0.0
    %463 = vmatprep.mubr.f32.mxu0 0.0
    %464 = vmatmul.mubr.f32.gmra.mrb[0].mxu0 %v397
    %v465 = vpop.f32.mrb[0].mxu0
    %v466 = vadd.f32 0.0, %v465
    %v467 = vpop.f32.mrb[0].mxu0
    %v468 = vadd.f32 0.0, %v467
    %469 = vdwg.mxu0
    %v470 = vadd.f32 %v393, %v466
    %v471 = vadd.f32 %v394, %v468
    %v472 = vxor.u32 %v470, 2147483648
    %v473 = vxor.u32 %v471, 2147483648
    %v474 = vmul.f32 %v472, 1.442695
    %v475 = vpow.pop %v474
    %v476 = vmul.f32 %v473, 1.442695
    %v477 = vpow.pop %v476
    %v478 = vadd.f32 %v475, 1.0
    %v479 = vadd.f32 %v477, 1.0
    %v480 = vrcp.pop %v478
    %v481 = vmul.f32 1.0, %v480
    %v482 = vrcp.pop %v479
    %v483 = vmul.f32 1.0, %v482
    %v484 = vtanh.pop %v471
    %v485 = vmul.f32 %v481, 0.0
    %v486 = vmul.f32 %v481, %v484
    %488 = vrot.lane.b32.xlu0 %v486, 64
    %v489 = vpop.permute.xlu0 %488
    %v491 = vadd.f32 %v485, %v489
    %v492 = vtanh.pop %v491
    %v493 = vmul.f32 %v483, %v492
    %495 = vrot.lane.b32.xlu0 %v493, 64
    %v496 = vpop.permute.xlu0 %495
    %498 = vst.msk [vmem:[#allocation3] sm:$0xff] %vm66, %v496
    %vm499 = vcmask 523520
    %500 = vst.msk [vmem:[#allocation3 + $0x38] sm:$0xff] %vm499, %v496
    %v501 = vld [vmem:[#allocation2 + $0x10] sm:$0xff]
    %v502 = vld [vmem:[#allocation2 + $0x18] sm:$0xff]
    %v503 = vsel %vm395, %v496, 0
    %505 = vmatprep.subr.mxu0 %v378
    %506 = vmatpush1.msra.mxu0 %v377
    %507 = vmatprep.subr.mxu0 %v380
    %508 = vmatpush1.msra.mxu0 %v379
    %509 = vmatprep.subr.mxu0 %v382
    %510 = vmatpush1.msra.mxu0 %v381
    %511 = vmatprep.subr.mxu0 %v384
    %512 = vmatpush1.msra.mxu0 %v383
    %513 = vmatprep.subr.mxu0 %v386
    %514 = vmatpush1.msra.mxu0 %v385
    %515 = vmatprep.subr.mxu0 %v388
    %516 = vmatpush1.msra.mxu0 %v387
    %517 = vmatprep.subr.mxu0 %v390
    %518 = vmatpush1.msra.mxu0 %v389
    %519 = vmatprep.subr.mxu0 %v392
    %520 = vmatpush1.msra.mxu0 %v391
    %521 = vmatprep.subr.mxu0 0.0
    %522 = vmatpush1.msra.mxu0 0.0
    %523 = vmatprep.subr.mxu0 0.0
    %524 = vmatpush1.msra.mxu0 0.0
    %525 = vmatprep.subr.mxu0 0.0
    %526 = vmatpush1.msra.mxu0 0.0
    %527 = vmatprep.subr.mxu0 0.0
    %528 = vmatpush1.msra.mxu0 0.0
    %529 = vmatprep.subr.mxu0 0.0
    %530 = vmatpush1.msra.mxu0 0.0
    %531 = vmatprep.subr.mxu0 0.0
    %532 = vmatpush1.msra.mxu0 0.0
    %533 = vmatprep.subr.mxu0 0.0
    %534 = vmatpush1.msra.mxu0 0.0
    %535 = vmatprep.subr.mxu0 0.0
    %536 = vmatpush1.msra.mxu0 0.0
    %537 = vmatprep.subr.mxu0 0.0
    %538 = vmatpush1.msra.mxu0 0.0
    %539 = vmatprep.subr.mxu0 0.0
    %540 = vmatpush1.msra.mxu0 0.0
    %541 = vmatprep.subr.mxu0 0.0
    %542 = vmatpush1.msra.mxu0 0.0
    %543 = vmatprep.subr.mxu0 0.0
    %544 = vmatpush1.msra.mxu0 0.0
    %545 = vmatprep.subr.mxu0 0.0
    %546 = vmatpush1.msra.mxu0 0.0
    %547 = vmatprep.subr.mxu0 0.0
    %548 = vmatpush1.msra.mxu0 0.0
    %549 = vmatprep.subr.mxu0 0.0
    %550 = vmatpush1.msra.mxu0 0.0
    %551 = vmatprep.subr.mxu0 0.0
    %552 = vmatpush1.msra.mxu0 0.0
    %553 = vmatprep.subr.mxu0 0.0
    %554 = vmatpush1.msra.mxu0 0.0
    %555 = vmatprep.subr.mxu0 0.0
    %556 = vmatpush1.msra.mxu0 0.0
    %557 = vmatprep.subr.mxu0 0.0
    %558 = vmatpush1.msra.mxu0 0.0
    %559 = vmatprep.subr.mxu0 0.0
    %560 = vmatpush1.msra.mxu0 0.0
    %561 = vmatprep.subr.mxu0 0.0
    %562 = vmatpush1.msra.mxu0 0.0
    %563 = vmatprep.subr.mxu0 0.0
    %564 = vmatpush1.msra.mxu0 0.0
    %565 = vmatprep.subr.mxu0 0.0
    %566 = vmatpush1.msra.mxu0 0.0
    %567 = vmatprep.subr.mxu0 0.0
    %568 = vmatpush1.msra.mxu0 0.0
    %569 = vmatprep.mubr.f32.mxu0 0.0
    %570 = vmatmul.mubr.f32.gmra.mrb[0].mxu0 %v503
    %v571 = vpop.f32.mrb[0].mxu0
    %v572 = vadd.f32 0.0, %v571
    %v573 = vpop.f32.mrb[0].mxu0
    %v574 = vadd.f32 0.0, %v573
    %575 = vdwg.mxu0
    %v576 = vadd.f32 %v501, %v572
    %v577 = vadd.f32 %v502, %v574
    %v578 = vxor.u32 %v576, 2147483648
    %v579 = vxor.u32 %v577, 2147483648
    %v580 = vmul.f32 %v578, 1.442695
    %v581 = vpow.pop %v580
    %v582 = vmul.f32 %v579, 1.442695
    %v583 = vpow.pop %v582
    %v584 = vadd.f32 %v581, 1.0
    %v585 = vadd.f32 %v583, 1.0
    %v586 = vrcp.pop %v584
    %v587 = vmul.f32 1.0, %v586
    %v588 = vrcp.pop %v585
    %v589 = vmul.f32 1.0, %v588
    %v590 = vtanh.pop %v577
    %v591 = vmul.f32 %v587, %v491
    %v592 = vmul.f32 %v587, %v590
    %594 = vrot.lane.b32.xlu0 %v592, 64
    %v595 = vpop.permute.xlu0 %594
    %v597 = vadd.f32 %v591, %v595
    %v598 = vtanh.pop %v597
    %v599 = vmul.f32 %v589, %v598
    %601 = vrot.lane.b32.xlu0 %v599, 64
    %v602 = vpop.permute.xlu0 %601
    %604 = vst.msk [vmem:[#allocation3 + $0x8] sm:$0xff] %vm66, %v602
    %605 = vst.msk [vmem:[#allocation3 + $0x30] sm:$0xff] %vm499, %v602
    %v606 = vld [vmem:[#allocation2 + $0x20] sm:$0xff]
    %v607 = vld [vmem:[#allocation2 + $0x28] sm:$0xff]
    %v608 = vsel %vm395, %v602, 0
    %610 = vmatprep.subr.mxu0 %v378
    %611 = vmatpush1.msra.mxu0 %v377
    %612 = vmatprep.subr.mxu0 %v380
    %613 = vmatpush1.msra.mxu0 %v379
    %614 = vmatprep.subr.mxu0 %v382
    %615 = vmatpush1.msra.mxu0 %v381
    %616 = vmatprep.subr.mxu0 %v384
    %617 = vmatpush1.msra.mxu0 %v383
    %618 = vmatprep.subr.mxu0 %v386
    %619 = vmatpush1.msra.mxu0 %v385
    %620 = vmatprep.subr.mxu0 %v388
    %621 = vmatpush1.msra.mxu0 %v387
    %622 = vmatprep.subr.mxu0 %v390
    %623 = vmatpush1.msra.mxu0 %v389
    %624 = vmatprep.subr.mxu0 %v392
    %625 = vmatpush1.msra.mxu0 %v391
    %626 = vmatprep.subr.mxu0 0.0
    %627 = vmatpush1.msra.mxu0 0.0
    %628 = vmatprep.subr.mxu0 0.0
    %629 = vmatpush1.msra.mxu0 0.0
    %630 = vmatprep.subr.mxu0 0.0
    %631 = vmatpush1.msra.mxu0 0.0
    %632 = vmatprep.subr.mxu0 0.0
    %633 = vmatpush1.msra.mxu0 0.0
    %634 = vmatprep.subr.mxu0 0.0
    %635 = vmatpush1.msra.mxu0 0.0
    %636 = vmatprep.subr.mxu0 0.0
    %637 = vmatpush1.msra.mxu0 0.0
    %638 = vmatprep.subr.mxu0 0.0
    %639 = vmatpush1.msra.mxu0 0.0
    %640 = vmatprep.subr.mxu0 0.0
    %641 = vmatpush1.msra.mxu0 0.0
    %642 = vmatprep.subr.mxu0 0.0
    %643 = vmatpush1.msra.mxu0 0.0
    %644 = vmatprep.subr.mxu0 0.0
    %645 = vmatpush1.msra.mxu0 0.0
    %646 = vmatprep.subr.mxu0 0.0
    %647 = vmatpush1.msra.mxu0 0.0
    %648 = vmatprep.subr.mxu0 0.0
    %649 = vmatpush1.msra.mxu0 0.0
    %650 = vmatprep.subr.mxu0 0.0
    %651 = vmatpush1.msra.mxu0 0.0
    %652 = vmatprep.subr.mxu0 0.0
    %653 = vmatpush1.msra.mxu0 0.0
    %654 = vmatprep.subr.mxu0 0.0
    %655 = vmatpush1.msra.mxu0 0.0
    %656 = vmatprep.subr.mxu0 0.0
    %657 = vmatpush1.msra.mxu0 0.0
    %658 = vmatprep.subr.mxu0 0.0
    %659 = vmatpush1.msra.mxu0 0.0
    %660 = vmatprep.subr.mxu0 0.0
    %661 = vmatpush1.msra.mxu0 0.0
    %662 = vmatprep.subr.mxu0 0.0
    %663 = vmatpush1.msra.mxu0 0.0
    %664 = vmatprep.subr.mxu0 0.0
    %665 = vmatpush1.msra.mxu0 0.0
    %666 = vmatprep.subr.mxu0 0.0
    %667 = vmatpush1.msra.mxu0 0.0
    %668 = vmatprep.subr.mxu0 0.0
    %669 = vmatpush1.msra.mxu0 0.0
    %670 = vmatprep.subr.mxu0 0.0
    %671 = vmatpush1.msra.mxu0 0.0
    %672 = vmatprep.subr.mxu0 0.0
    %673 = vmatpush1.msra.mxu0 0.0
    %674 = vmatprep.mubr.f32.mxu0 0.0
    %675 = vmatmul.mubr.f32.gmra.mrb[0].mxu0 %v608
    %v676 = vpop.f32.mrb[0].mxu0
    %v677 = vadd.f32 0.0, %v676
    %v678 = vpop.f32.mrb[0].mxu0
    %v679 = vadd.f32 0.0, %v678
    %680 = vdwg.mxu0
    %v681 = vadd.f32 %v606, %v677
    %v682 = vadd.f32 %v607, %v679
    %v683 = vxor.u32 %v681, 2147483648
    %v684 = vxor.u32 %v682, 2147483648
    %v685 = vmul.f32 %v683, 1.442695
    %v686 = vpow.pop %v685
    %v687 = vmul.f32 %v684, 1.442695
    %v688 = vpow.pop %v687
    %v689 = vadd.f32 %v686, 1.0
    %v690 = vadd.f32 %v688, 1.0
    %v691 = vrcp.pop %v689
    %v692 = vmul.f32 1.0, %v691
    %v693 = vrcp.pop %v690
    %v694 = vmul.f32 1.0, %v693
    %v695 = vtanh.pop %v682
    %v696 = vmul.f32 %v692, %v597
    %v697 = vmul.f32 %v692, %v695
    %699 = vrot.lane.b32.xlu0 %v697, 64
    %v700 = vpop.permute.xlu0 %699
    %v702 = vadd.f32 %v696, %v700
    %v703 = vtanh.pop %v702
    %v704 = vmul.f32 %v694, %v703
    %706 = vrot.lane.b32.xlu0 %v704, 64
    %v707 = vpop.permute.xlu0 %706
    %709 = vst.msk [vmem:[#allocation3 + $0x10] sm:$0xff] %vm66, %v707
    %710 = vst.msk [vmem:[#allocation3 + $0x28] sm:$0xff] %vm499, %v707
    %v711 = vld [vmem:[#allocation2 + $0x30] sm:$0xff]
    %v712 = vld [vmem:[#allocation2 + $0x38] sm:$0xff]
    %v713 = vsel %vm395, %v707, 0
    %715 = vmatprep.subr.mxu0 %v378
    %716 = vmatpush1.msra.mxu0 %v377
    %717 = vmatprep.subr.mxu0 %v380
    %718 = vmatpush1.msra.mxu0 %v379
    %719 = vmatprep.subr.mxu0 %v382
    %720 = vmatpush1.msra.mxu0 %v381
    %721 = vmatprep.subr.mxu0 %v384
    %722 = vmatpush1.msra.mxu0 %v383
    %723 = vmatprep.subr.mxu0 %v386
    %724 = vmatpush1.msra.mxu0 %v385
    %725 = vmatprep.subr.mxu0 %v388
    %726 = vmatpush1.msra.mxu0 %v387
    %727 = vmatprep.subr.mxu0 %v390
    %728 = vmatpush1.msra.mxu0 %v389
    %729 = vmatprep.subr.mxu0 %v392
    %730 = vmatpush1.msra.mxu0 %v391
    %731 = vmatprep.subr.mxu0 0.0
    %732 = vmatpush1.msra.mxu0 0.0
    %733 = vmatprep.subr.mxu0 0.0
    %734 = vmatpush1.msra.mxu0 0.0
    %735 = vmatprep.subr.mxu0 0.0
    %736 = vmatpush1.msra.mxu0 0.0
    %737 = vmatprep.subr.mxu0 0.0
    %738 = vmatpush1.msra.mxu0 0.0
    %739 = vmatprep.subr.mxu0 0.0
    %740 = vmatpush1.msra.mxu0 0.0
    %741 = vmatprep.subr.mxu0 0.0
    %742 = vmatpush1.msra.mxu0 0.0
    %743 = vmatprep.subr.mxu0 0.0
    %744 = vmatpush1.msra.mxu0 0.0
    %745 = vmatprep.subr.mxu0 0.0
    %746 = vmatpush1.msra.mxu0 0.0
    %747 = vmatprep.subr.mxu0 0.0
    %748 = vmatpush1.msra.mxu0 0.0
    %749 = vmatprep.subr.mxu0 0.0
    %750 = vmatpush1.msra.mxu0 0.0
    %751 = vmatprep.subr.mxu0 0.0
    %752 = vmatpush1.msra.mxu0 0.0
    %753 = vmatprep.subr.mxu0 0.0
    %754 = vmatpush1.msra.mxu0 0.0
    %755 = vmatprep.subr.mxu0 0.0
    %756 = vmatpush1.msra.mxu0 0.0
    %757 = vmatprep.subr.mxu0 0.0
    %758 = vmatpush1.msra.mxu0 0.0
    %759 = vmatprep.subr.mxu0 0.0
    %760 = vmatpush1.msra.mxu0 0.0
    %761 = vmatprep.subr.mxu0 0.0
    %762 = vmatpush1.msra.mxu0 0.0
    %763 = vmatprep.subr.mxu0 0.0
    %764 = vmatpush1.msra.mxu0 0.0
    %765 = vmatprep.subr.mxu0 0.0
    %766 = vmatpush1.msra.mxu0 0.0
    %767 = vmatprep.subr.mxu0 0.0
    %768 = vmatpush1.msra.mxu0 0.0
    %769 = vmatprep.subr.mxu0 0.0
    %770 = vmatpush1.msra.mxu0 0.0
    %771 = vmatprep.subr.mxu0 0.0
    %772 = vmatpush1.msra.mxu0 0.0
    %773 = vmatprep.subr.mxu0 0.0
    %774 = vmatpush1.msra.mxu0 0.0
    %775 = vmatprep.subr.mxu0 0.0
    %776 = vmatpush1.msra.mxu0 0.0
    %777 = vmatprep.subr.mxu0 0.0
    %778 = vmatpush1.msra.mxu0 0.0
    %779 = vmatprep.mubr.f32.mxu0 0.0
    %780 = vmatmul.mubr.f32.gmra.mrb[0].mxu0 %v713
    %v781 = vpop.f32.mrb[0].mxu0
    %v782 = vadd.f32 0.0, %v781
    %v783 = vpop.f32.mrb[0].mxu0
    %v784 = vadd.f32 0.0, %v783
    %785 = vdwg.mxu0
    %v786 = vadd.f32 %v711, %v782
    %v787 = vadd.f32 %v712, %v784
    %v788 = vxor.u32 %v786, 2147483648
    %v789 = vxor.u32 %v787, 2147483648
    %v790 = vmul.f32 %v788, 1.442695
    %v791 = vpow.pop %v790
    %v792 = vmul.f32 %v789, 1.442695
    %v793 = vpow.pop %v792
    %v794 = vadd.f32 %v791, 1.0
    %v795 = vadd.f32 %v793, 1.0
    %v796 = vrcp.pop %v794
    %v797 = vmul.f32 1.0, %v796
    %v798 = vrcp.pop %v795
    %v799 = vmul.f32 1.0, %v798
    %v800 = vtanh.pop %v787
    %v801 = vmul.f32 %v797, %v702
    %v802 = vmul.f32 %v797, %v800
    %804 = vrot.lane.b32.xlu0 %v802, 64
    %v805 = vpop.permute.xlu0 %804
    %v807 = vadd.f32 %v801, %v805
    %v808 = vtanh.pop %v807
    %v809 = vmul.f32 %v799, %v808
    %811 = vrot.lane.b32.xlu0 %v809, 64
    %v812 = vpop.permute.xlu0 %811
    %814 = vst.msk [vmem:[#allocation3 + $0x18] sm:$0xff] %vm66, %v812
    %815 = vst.msk [vmem:[#allocation3 + $0x20] sm:$0xff] %vm499, %v812
    %v816 = vld [vmem:[#allocation2 + $0x40] sm:$0xff]
    %v817 = vld [vmem:[#allocation2 + $0x48] sm:$0xff]
    %v818 = vsel %vm395, %v812, 0
    %820 = vmatprep.subr.mxu0 %v378
    %821 = vmatpush1.msra.mxu0 %v377
    %822 = vmatprep.subr.mxu0 %v380
    %823 = vmatpush1.msra.mxu0 %v379
    %824 = vmatprep.subr.mxu0 %v382
    %825 = vmatpush1.msra.mxu0 %v381
    %826 = vmatprep.subr.mxu0 %v384
    %827 = vmatpush1.msra.mxu0 %v383
    %828 = vmatprep.subr.mxu0 %v386
    %829 = vmatpush1.msra.mxu0 %v385
    %830 = vmatprep.subr.mxu0 %v388
    %831 = vmatpush1.msra.mxu0 %v387
    %832 = vmatprep.subr.mxu0 %v390
    %833 = vmatpush1.msra.mxu0 %v389
    %834 = vmatprep.subr.mxu0 %v392
    %835 = vmatpush1.msra.mxu0 %v391
    %836 = vmatprep.subr.mxu0 0.0
    %837 = vmatpush1.msra.mxu0 0.0
    %838 = vmatprep.subr.mxu0 0.0
    %839 = vmatpush1.msra.mxu0 0.0
    %840 = vmatprep.subr.mxu0 0.0
    %841 = vmatpush1.msra.mxu0 0.0
    %842 = vmatprep.subr.mxu0 0.0
    %843 = vmatpush1.msra.mxu0 0.0
    %844 = vmatprep.subr.mxu0 0.0
    %845 = vmatpush1.msra.mxu0 0.0
    %846 = vmatprep.subr.mxu0 0.0
    %847 = vmatpush1.msra.mxu0 0.0
    %848 = vmatprep.subr.mxu0 0.0
    %849 = vmatpush1.msra.mxu0 0.0
    %850 = vmatprep.subr.mxu0 0.0
    %851 = vmatpush1.msra.mxu0 0.0
    %852 = vmatprep.subr.mxu0 0.0
    %853 = vmatpush1.msra.mxu0 0.0
    %854 = vmatprep.subr.mxu0 0.0
    %855 = vmatpush1.msra.mxu0 0.0
    %856 = vmatprep.subr.mxu0 0.0
    %857 = vmatpush1.msra.mxu0 0.0
    %858 = vmatprep.subr.mxu0 0.0
    %859 = vmatpush1.msra.mxu0 0.0
    %860 = vmatprep.subr.mxu0 0.0
    %861 = vmatpush1.msra.mxu0 0.0
    %862 = vmatprep.subr.mxu0 0.0
    %863 = vmatpush1.msra.mxu0 0.0
    %864 = vmatprep.subr.mxu0 0.0
    %865 = vmatpush1.msra.mxu0 0.0
    %866 = vmatprep.subr.mxu0 0.0
    %867 = vmatpush1.msra.mxu0 0.0
    %868 = vmatprep.subr.mxu0 0.0
    %869 = vmatpush1.msra.mxu0 0.0
    %870 = vmatprep.subr.mxu0 0.0
    %871 = vmatpush1.msra.mxu0 0.0
    %872 = vmatprep.subr.mxu0 0.0
    %873 = vmatpush1.msra.mxu0 0.0
    %874 = vmatprep.subr.mxu0 0.0
    %875 = vmatpush1.msra.mxu0 0.0
    %876 = vmatprep.subr.mxu0 0.0
    %877 = vmatpush1.msra.mxu0 0.0
    %878 = vmatprep.subr.mxu0 0.0
    %879 = vmatpush1.msra.mxu0 0.0
    %880 = vmatprep.subr.mxu0 0.0
    %881 = vmatpush1.msra.mxu0 0.0
    %882 = vmatprep.subr.mxu0 0.0
    %883 = vmatpush1.msra.mxu0 0.0
    %884 = vmatprep.mubr.f32.mxu0 0.0
    %885 = vmatmul.mubr.f32.gmra.mrb[0].mxu0 %v818
    %v886 = vpop.f32.mrb[0].mxu0
    %v887 = vadd.f32 0.0, %v886
    %v888 = vpop.f32.mrb[0].mxu0
    %v889 = vadd.f32 0.0, %v888
    %890 = vdwg.mxu0
    %v891 = vadd.f32 %v816, %v887
    %v892 = vadd.f32 %v817, %v889
    %v893 = vxor.u32 %v891, 2147483648
    %v894 = vxor.u32 %v892, 2147483648
    %v895 = vmul.f32 %v893, 1.442695
    %v896 = vpow.pop %v895
    %v897 = vmul.f32 %v894, 1.442695
    %v898 = vpow.pop %v897
    %v899 = vadd.f32 %v896, 1.0
    %v900 = vadd.f32 %v898, 1.0
    %v901 = vrcp.pop %v899
    %v902 = vmul.f32 1.0, %v901
    %v903 = vrcp.pop %v900
    %v904 = vmul.f32 1.0, %v903
    %v905 = vtanh.pop %v892
    %v906 = vmul.f32 %v902, %v807
    %v907 = vmul.f32 %v902, %v905
    %909 = vrot.lane.b32.xlu0 %v907, 64
    %v910 = vpop.permute.xlu0 %909
    %v912 = vadd.f32 %v906, %v910
    %v913 = vtanh.pop %v912
    %v914 = vmul.f32 %v904, %v913
    %916 = vrot.lane.b32.xlu0 %v914, 64
    %v917 = vpop.permute.xlu0 %916
    %919 = vst.msk [vmem:[#allocation3 + $0x20] sm:$0xff] %vm66, %v917
    %920 = vst.msk [vmem:[#allocation3 + $0x18] sm:$0xff] %vm499, %v917
    %v921 = vld [vmem:[#allocation2 + $0x50] sm:$0xff]
    %v922 = vld [vmem:[#allocation2 + $0x58] sm:$0xff]
    %v923 = vsel %vm395, %v917, 0
    %925 = vmatprep.subr.mxu0 %v378
    %926 = vmatpush1.msra.mxu0 %v377
    %927 = vmatprep.subr.mxu0 %v380
    %928 = vmatpush1.msra.mxu0 %v379
    %929 = vmatprep.subr.mxu0 %v382
    %930 = vmatpush1.msra.mxu0 %v381
    %931 = vmatprep.subr.mxu0 %v384
    %932 = vmatpush1.msra.mxu0 %v383
    %933 = vmatprep.subr.mxu0 %v386
    %934 = vmatpush1.msra.mxu0 %v385
    %935 = vmatprep.subr.mxu0 %v388
    %936 = vmatpush1.msra.mxu0 %v387
    %937 = vmatprep.subr.mxu0 %v390
    %938 = vmatpush1.msra.mxu0 %v389
    %939 = vmatprep.subr.mxu0 %v392
    %940 = vmatpush1.msra.mxu0 %v391
    %941 = vmatprep.subr.mxu0 0.0
    %942 = vmatpush1.msra.mxu0 0.0
    %943 = vmatprep.subr.mxu0 0.0
    %944 = vmatpush1.msra.mxu0 0.0
    %945 = vmatprep.subr.mxu0 0.0
    %946 = vmatpush1.msra.mxu0 0.0
    %947 = vmatprep.subr.mxu0 0.0
    %948 = vmatpush1.msra.mxu0 0.0
    %949 = vmatprep.subr.mxu0 0.0
    %950 = vmatpush1.msra.mxu0 0.0
    %951 = vmatprep.subr.mxu0 0.0
    %952 = vmatpush1.msra.mxu0 0.0
    %953 = vmatprep.subr.mxu0 0.0
    %954 = vmatpush1.msra.mxu0 0.0
    %955 = vmatprep.subr.mxu0 0.0
    %956 = vmatpush1.msra.mxu0 0.0
    %957 = vmatprep.subr.mxu0 0.0
    %958 = vmatpush1.msra.mxu0 0.0
    %959 = vmatprep.subr.mxu0 0.0
    %960 = vmatpush1.msra.mxu0 0.0
    %961 = vmatprep.subr.mxu0 0.0
    %962 = vmatpush1.msra.mxu0 0.0
    %963 = vmatprep.subr.mxu0 0.0
    %964 = vmatpush1.msra.mxu0 0.0
    %965 = vmatprep.subr.mxu0 0.0
    %966 = vmatpush1.msra.mxu0 0.0
    %967 = vmatprep.subr.mxu0 0.0
    %968 = vmatpush1.msra.mxu0 0.0
    %969 = vmatprep.subr.mxu0 0.0
    %970 = vmatpush1.msra.mxu0 0.0
    %971 = vmatprep.subr.mxu0 0.0
    %972 = vmatpush1.msra.mxu0 0.0
    %973 = vmatprep.subr.mxu0 0.0
    %974 = vmatpush1.msra.mxu0 0.0
    %975 = vmatprep.subr.mxu0 0.0
    %976 = vmatpush1.msra.mxu0 0.0
    %977 = vmatprep.subr.mxu0 0.0
    %978 = vmatpush1.msra.mxu0 0.0
    %979 = vmatprep.subr.mxu0 0.0
    %980 = vmatpush1.msra.mxu0 0.0
    %981 = vmatprep.subr.mxu0 0.0
    %982 = vmatpush1.msra.mxu0 0.0
    %983 = vmatprep.subr.mxu0 0.0
    %984 = vmatpush1.msra.mxu0 0.0
    %985 = vmatprep.subr.mxu0 0.0
    %986 = vmatpush1.msra.mxu0 0.0
    %987 = vmatprep.subr.mxu0 0.0
    %988 = vmatpush1.msra.mxu0 0.0
    %989 = vmatprep.mubr.f32.mxu0 0.0
    %990 = vmatmul.mubr.f32.gmra.mrb[0].mxu0 %v923
    %v991 = vpop.f32.mrb[0].mxu0
    %v992 = vadd.f32 0.0, %v991
    %v993 = vpop.f32.mrb[0].mxu0
    %v994 = vadd.f32 0.0, %v993
    %995 = vdwg.mxu0
    %v996 = vadd.f32 %v921, %v992
    %v997 = vadd.f32 %v922, %v994
    %v998 = vxor.u32 %v996, 2147483648
    %v999 = vxor.u32 %v997, 2147483648
    %v1000 = vmul.f32 %v998, 1.442695
    %v1001 = vpow.pop %v1000
    %v1002 = vmul.f32 %v999, 1.442695
    %v1003 = vpow.pop %v1002
    %v1004 = vadd.f32 %v1001, 1.0
    %v1005 = vadd.f32 %v1003, 1.0
    %v1006 = vrcp.pop %v1004
    %v1007 = vmul.f32 1.0, %v1006
    %v1008 = vrcp.pop %v1005
    %v1009 = vmul.f32 1.0, %v1008
    %v1010 = vtanh.pop %v997
    %v1011 = vmul.f32 %v1007, %v912
    %v1012 = vmul.f32 %v1007, %v1010
    %1014 = vrot.lane.b32.xlu0 %v1012, 64
    %v1015 = vpop.permute.xlu0 %1014
    %v1017 = vadd.f32 %v1011, %v1015
    %v1018 = vtanh.pop %v1017
    %v1019 = vmul.f32 %v1009, %v1018
    %1021 = vrot.lane.b32.xlu0 %v1019, 64
    %v1022 = vpop.permute.xlu0 %1021
    %1024 = vst.msk [vmem:[#allocation3 + $0x28] sm:$0xff] %vm66, %v1022
    %1025 = vst.msk [vmem:[#allocation3 + $0x10] sm:$0xff] %vm499, %v1022
    %v1026 = vld [vmem:[#allocation2 + $0x60] sm:$0xff]
    %v1027 = vld [vmem:[#allocation2 + $0x68] sm:$0xff]
    %v1028 = vsel %vm395, %v1022, 0
    %1030 = vmatprep.subr.mxu0 %v378
    %1031 = vmatpush1.msra.mxu0 %v377
    %1032 = vmatprep.subr.mxu0 %v380
    %1033 = vmatpush1.msra.mxu0 %v379
    %1034 = vmatprep.subr.mxu0 %v382
    %1035 = vmatpush1.msra.mxu0 %v381
    %1036 = vmatprep.subr.mxu0 %v384
    %1037 = vmatpush1.msra.mxu0 %v383
    %1038 = vmatprep.subr.mxu0 %v386
    %1039 = vmatpush1.msra.mxu0 %v385
    %1040 = vmatprep.subr.mxu0 %v388
    %1041 = vmatpush1.msra.mxu0 %v387
    %1042 = vmatprep.subr.mxu0 %v390
    %1043 = vmatpush1.msra.mxu0 %v389
    %1044 = vmatprep.subr.mxu0 %v392
    %1045 = vmatpush1.msra.mxu0 %v391
    %1046 = vmatprep.subr.mxu0 0.0
    %1047 = vmatpush1.msra.mxu0 0.0
    %1048 = vmatprep.subr.mxu0 0.0
    %1049 = vmatpush1.msra.mxu0 0.0
    %1050 = vmatprep.subr.mxu0 0.0
    %1051 = vmatpush1.msra.mxu0 0.0
    %1052 = vmatprep.subr.mxu0 0.0
    %1053 = vmatpush1.msra.mxu0 0.0
    %1054 = vmatprep.subr.mxu0 0.0
    %1055 = vmatpush1.msra.mxu0 0.0
    %1056 = vmatprep.subr.mxu0 0.0
    %1057 = vmatpush1.msra.mxu0 0.0
    %1058 = vmatprep.subr.mxu0 0.0
    %1059 = vmatpush1.msra.mxu0 0.0
    %1060 = vmatprep.subr.mxu0 0.0
    %1061 = vmatpush1.msra.mxu0 0.0
    %1062 = vmatprep.subr.mxu0 0.0
    %1063 = vmatpush1.msra.mxu0 0.0
    %1064 = vmatprep.subr.mxu0 0.0
    %1065 = vmatpush1.msra.mxu0 0.0
    %1066 = vmatprep.subr.mxu0 0.0
    %1067 = vmatpush1.msra.mxu0 0.0
    %1068 = vmatprep.subr.mxu0 0.0
    %1069 = vmatpush1.msra.mxu0 0.0
    %1070 = vmatprep.subr.mxu0 0.0
    %1071 = vmatpush1.msra.mxu0 0.0
    %1072 = vmatprep.subr.mxu0 0.0
    %1073 = vmatpush1.msra.mxu0 0.0
    %1074 = vmatprep.subr.mxu0 0.0
    %1075 = vmatpush1.msra.mxu0 0.0
    %1076 = vmatprep.subr.mxu0 0.0
    %1077 = vmatpush1.msra.mxu0 0.0
    %1078 = vmatprep.subr.mxu0 0.0
    %1079 = vmatpush1.msra.mxu0 0.0
    %1080 = vmatprep.subr.mxu0 0.0
    %1081 = vmatpush1.msra.mxu0 0.0
    %1082 = vmatprep.subr.mxu0 0.0
    %1083 = vmatpush1.msra.mxu0 0.0
    %1084 = vmatprep.subr.mxu0 0.0
    %1085 = vmatpush1.msra.mxu0 0.0
    %1086 = vmatprep.subr.mxu0 0.0
    %1087 = vmatpush1.msra.mxu0 0.0
    %1088 = vmatprep.subr.mxu0 0.0
    %1089 = vmatpush1.msra.mxu0 0.0
    %1090 = vmatprep.subr.mxu0 0.0
    %1091 = vmatpush1.msra.mxu0 0.0
    %1092 = vmatprep.subr.mxu0 0.0
    %1093 = vmatpush1.msra.mxu0 0.0
    %1094 = vmatprep.mubr.f32.mxu0 0.0
    %1095 = vmatmul.mubr.f32.gmra.mrb[0].mxu0 %v1028
    %v1096 = vpop.f32.mrb[0].mxu0
    %v1097 = vadd.f32 0.0, %v1096
    %v1098 = vpop.f32.mrb[0].mxu0
    %v1099 = vadd.f32 0.0, %v1098
    %1100 = vdwg.mxu0
    %v1101 = vadd.f32 %v1026, %v1097
    %v1102 = vadd.f32 %v1027, %v1099
    %v1103 = vxor.u32 %v1101, 2147483648
    %v1104 = vxor.u32 %v1102, 2147483648
    %v1105 = vmul.f32 %v1103, 1.442695
    %v1106 = vpow.pop %v1105
    %v1107 = vmul.f32 %v1104, 1.442695
    %v1108 = vpow.pop %v1107
    %v1109 = vadd.f32 %v1106, 1.0
    %v1110 = vadd.f32 %v1108, 1.0
    %v1111 = vrcp.pop %v1109
    %v1112 = vmul.f32 1.0, %v1111
    %v1113 = vrcp.pop %v1110
    %v1114 = vmul.f32 1.0, %v1113
    %v1115 = vtanh.pop %v1102
    %v1116 = vmul.f32 %v1112, %v1017
    %v1117 = vmul.f32 %v1112, %v1115
    %1119 = vrot.lane.b32.xlu0 %v1117, 64
    %v1120 = vpop.permute.xlu0 %1119
    %v1122 = vadd.f32 %v1116, %v1120
    %v1123 = vtanh.pop %v1122
    %v1124 = vmul.f32 %v1114, %v1123
    %1126 = vrot.lane.b32.xlu0 %v1124, 64
    %v1127 = vpop.permute.xlu0 %1126
    %1129 = vst.msk [vmem:[#allocation3 + $0x30] sm:$0xff] %vm66, %v1127
    %1130 = vst.msk [vmem:[#allocation3 + $0x8] sm:$0xff] %vm499, %v1127
    %v1131 = vld [vmem:[#allocation2 + $0x70] sm:$0xff]
    %v1132 = vld [vmem:[#allocation2 + $0x78] sm:$0xff]
    %v1133 = vsel %vm395, %v1127, 0
    %1135 = vmatprep.subr.mxu0 %v378
    %1136 = vmatpush1.msra.mxu0 %v377
    %1137 = vmatprep.subr.mxu0 %v380
    %1138 = vmatpush1.msra.mxu0 %v379
    %1139 = vmatprep.subr.mxu0 %v382
    %1140 = vmatpush1.msra.mxu0 %v381
    %1141 = vmatprep.subr.mxu0 %v384
    %1142 = vmatpush1.msra.mxu0 %v383
    %1143 = vmatprep.subr.mxu0 %v386
    %1144 = vmatpush1.msra.mxu0 %v385
    %1145 = vmatprep.subr.mxu0 %v388
    %1146 = vmatpush1.msra.mxu0 %v387
    %1147 = vmatprep.subr.mxu0 %v390
    %1148 = vmatpush1.msra.mxu0 %v389
    %1149 = vmatprep.subr.mxu0 %v392
    %1150 = vmatpush1.msra.mxu0 %v391
    %1151 = vmatprep.subr.mxu0 0.0
    %1152 = vmatpush1.msra.mxu0 0.0
    %1153 = vmatprep.subr.mxu0 0.0
    %1154 = vmatpush1.msra.mxu0 0.0
    %1155 = vmatprep.subr.mxu0 0.0
    %1156 = vmatpush1.msra.mxu0 0.0
    %1157 = vmatprep.subr.mxu0 0.0
    %1158 = vmatpush1.msra.mxu0 0.0
    %1159 = vmatprep.subr.mxu0 0.0
    %1160 = vmatpush1.msra.mxu0 0.0
    %1161 = vmatprep.subr.mxu0 0.0
    %1162 = vmatpush1.msra.mxu0 0.0
    %1163 = vmatprep.subr.mxu0 0.0
    %1164 = vmatpush1.msra.mxu0 0.0
    %1165 = vmatprep.subr.mxu0 0.0
    %1166 = vmatpush1.msra.mxu0 0.0
    %1167 = vmatprep.subr.mxu0 0.0
    %1168 = vmatpush1.msra.mxu0 0.0
    %1169 = vmatprep.subr.mxu0 0.0
    %1170 = vmatpush1.msra.mxu0 0.0
    %1171 = vmatprep.subr.mxu0 0.0
    %1172 = vmatpush1.msra.mxu0 0.0
    %1173 = vmatprep.subr.mxu0 0.0
    %1174 = vmatpush1.msra.mxu0 0.0
    %1175 = vmatprep.subr.mxu0 0.0
    %1176 = vmatpush1.msra.mxu0 0.0
    %1177 = vmatprep.subr.mxu0 0.0
    %1178 = vmatpush1.msra.mxu0 0.0
    %1179 = vmatprep.subr.mxu0 0.0
    %1180 = vmatpush1.msra.mxu0 0.0
    %1181 = vmatprep.subr.mxu0 0.0
    %1182 = vmatpush1.msra.mxu0 0.0
    %1183 = vmatprep.subr.mxu0 0.0
    %1184 = vmatpush1.msra.mxu0 0.0
    %1185 = vmatprep.subr.mxu0 0.0
    %1186 = vmatpush1.msra.mxu0 0.0
    %1187 = vmatprep.subr.mxu0 0.0
    %1188 = vmatpush1.msra.mxu0 0.0
    %1189 = vmatprep.subr.mxu0 0.0
    %1190 = vmatpush1.msra.mxu0 0.0
    %1191 = vmatprep.subr.mxu0 0.0
    %1192 = vmatpush1.msra.mxu0 0.0
    %1193 = vmatprep.subr.mxu0 0.0
    %1194 = vmatpush1.msra.mxu0 0.0
    %1195 = vmatprep.subr.mxu0 0.0
    %1196 = vmatpush1.msra.mxu0 0.0
    %1197 = vmatprep.subr.mxu0 0.0
    %1198 = vmatpush1.msra.mxu0 0.0
    %1199 = vmatprep.mubr.f32.mxu0 0.0
    %1200 = vmatmul.mubr.f32.gmra.mrb[0].mxu0 %v1133
    %v1201 = vpop.f32.mrb[0].mxu0
    %v1202 = vadd.f32 0.0, %v1201
    %v1203 = vpop.f32.mrb[0].mxu0
    %v1204 = vadd.f32 0.0, %v1203
    %1205 = vdwg.mxu0
    %v1206 = vadd.f32 %v1131, %v1202
    %v1207 = vadd.f32 %v1132, %v1204
    %v1208 = vxor.u32 %v1206, 2147483648
    %v1209 = vxor.u32 %v1207, 2147483648
    %v1210 = vmul.f32 %v1208, 1.442695
    %v1211 = vpow.pop %v1210
    %v1212 = vmul.f32 %v1209, 1.442695
    %v1213 = vpow.pop %v1212
    %v1214 = vadd.f32 %v1211, 1.0
    %v1215 = vadd.f32 %v1213, 1.0
    %v1216 = vrcp.pop %v1214
    %v1217 = vmul.f32 1.0, %v1216
    %v1218 = vrcp.pop %v1215
    %v1219 = vmul.f32 1.0, %v1218
    %v1220 = vtanh.pop %v1207
    %v1221 = vmul.f32 %v1217, %v1122
    %v1222 = vmul.f32 %v1217, %v1220
    %1224 = vrot.lane.b32.xlu0 %v1222, 64
    %v1225 = vpop.permute.xlu0 %1224
    %v1227 = vadd.f32 %v1221, %v1225
    %v1228 = vtanh.pop %v1227
    %v1229 = vmul.f32 %v1219, %v1228
    %1231 = vrot.lane.b32.xlu0 %v1229, 64
    %v1232 = vpop.permute.xlu0 %1231
    %1234 = vst.msk [vmem:[#allocation3 + $0x38] sm:$0xff] %vm66, %v1232
    %1235 = vst.msk [vmem:[#allocation3] sm:$0xff] %vm499, %v1232
    %v1236 = vld [vmem:[#allocation3] sm:$0xff]
    %v1237 = vld [vmem:[#allocation3 + $0x8] sm:$0xff]
    %v1238 = vld [vmem:[#allocation3 + $0x10] sm:$0xff]
    %v1239 = vld [vmem:[#allocation3 + $0x18] sm:$0xff]
    %v1240 = vld [vmem:[#allocation3 + $0x20] sm:$0xff]
    %v1241 = vld [vmem:[#allocation3 + $0x28] sm:$0xff]
    %v1242 = vld [vmem:[#allocation3 + $0x30] sm:$0xff]
    %v1243 = vld [vmem:[#allocation3 + $0x38] sm:$0xff]
    %v1244 = vld [vmem:[%s6] sm:$0xff]
    %v1245 = vld [vmem:[%s6 + $0x8] sm:$0xff]
    %v1246 = vld [vmem:[%s6 + $0x10] sm:$0xff]
    %v1247 = vld [vmem:[%s6 + $0x18] sm:$0xff]
    %v1248 = vld [vmem:[%s6 + $0x20] sm:$0xff]
    %v1249 = vld [vmem:[%s6 + $0x28] sm:$0xff]
    %v1250 = vld [vmem:[%s6 + $0x30] sm:$0xff]
    %v1251 = vld [vmem:[%s6 + $0x38] sm:$0xff]
    %v1252 = vld [vmem:[%s7] sm:$0x1]
    %v1254 = vlaneseq
    %v1255 = vshrl.u32 %v1254, 7
    %v1256 = vsub.s32 0, %v1255
    %v1257 = vrot.slane %v1252, %v1256
    %v1260 = vsel %vm395, %v1236, 0
    %v1263 = vsel %vm395, %v1237, 0
    %v1266 = vsel %vm395, %v1238, 0
    %v1269 = vsel %vm395, %v1239, 0
    %v1272 = vsel %vm395, %v1240, 0
    %v1275 = vsel %vm395, %v1241, 0
    %v1278 = vsel %vm395, %v1242, 0
    %v1281 = vsel %vm395, %v1243, 0
    %1283 = vmatprep.subr.mxu0 0.0
    %1284 = vmatpush1.msra.mxu0 %v1244
    %1285 = vmatprep.subr.mxu0 0.0
    %1286 = vmatpush1.msra.mxu0 %v1245
    %1287 = vmatprep.subr.mxu0 0.0
    %1288 = vmatpush1.msra.mxu0 %v1246
    %1289 = vmatprep.subr.mxu0 0.0
    %1290 = vmatpush1.msra.mxu0 %v1247
    %1291 = vmatprep.subr.mxu0 0.0
    %1292 = vmatpush1.msra.mxu0 %v1248
    %1293 = vmatprep.subr.mxu0 0.0
    %1294 = vmatpush1.msra.mxu0 %v1249
    %1295 = vmatprep.subr.mxu0 0.0
    %1296 = vmatpush1.msra.mxu0 %v1250
    %1297 = vmatprep.subr.mxu0 0.0
    %1298 = vmatpush1.msra.mxu0 %v1251
    %1299 = vmatprep.subr.mxu0 0.0
    %1300 = vmatpush1.msra.mxu0 0.0
    %1301 = vmatprep.subr.mxu0 0.0
    %1302 = vmatpush1.msra.mxu0 0.0
    %1303 = vmatprep.subr.mxu0 0.0
    %1304 = vmatpush1.msra.mxu0 0.0
    %1305 = vmatprep.subr.mxu0 0.0
    %1306 = vmatpush1.msra.mxu0 0.0
    %1307 = vmatprep.subr.mxu0 0.0
    %1308 = vmatpush1.msra.mxu0 0.0
    %1309 = vmatprep.subr.mxu0 0.0
    %1310 = vmatpush1.msra.mxu0 0.0
    %1311 = vmatprep.subr.mxu0 0.0
    %1312 = vmatpush1.msra.mxu0 0.0
    %1313 = vmatprep.subr.mxu0 0.0
    %1314 = vmatpush1.msra.mxu0 0.0
    %1315 = vmatprep.subr.mxu0 0.0
    %1316 = vmatpush1.msra.mxu0 0.0
    %1317 = vmatprep.subr.mxu0 0.0
    %1318 = vmatpush1.msra.mxu0 0.0
    %1319 = vmatprep.subr.mxu0 0.0
    %1320 = vmatpush1.msra.mxu0 0.0
    %1321 = vmatprep.subr.mxu0 0.0
    %1322 = vmatpush1.msra.mxu0 0.0
    %1323 = vmatprep.subr.mxu0 0.0
    %1324 = vmatpush1.msra.mxu0 0.0
    %1325 = vmatprep.subr.mxu0 0.0
    %1326 = vmatpush1.msra.mxu0 0.0
    %1327 = vmatprep.subr.mxu0 0.0
    %1328 = vmatpush1.msra.mxu0 0.0
    %1329 = vmatprep.subr.mxu0 0.0
    %1330 = vmatpush1.msra.mxu0 0.0
    %1331 = vmatprep.subr.mxu0 0.0
    %1332 = vmatpush1.msra.mxu0 0.0
    %1333 = vmatprep.subr.mxu0 0.0
    %1334 = vmatpush1.msra.mxu0 0.0
    %1335 = vmatprep.subr.mxu0 0.0
    %1336 = vmatpush1.msra.mxu0 0.0
    %1337 = vmatprep.subr.mxu0 0.0
    %1338 = vmatpush1.msra.mxu0 0.0
    %1339 = vmatprep.subr.mxu0 0.0
    %1340 = vmatpush1.msra.mxu0 0.0
    %1341 = vmatprep.subr.mxu0 0.0
    %1342 = vmatpush1.msra.mxu0 0.0
    %1343 = vmatprep.subr.mxu0 0.0
    %1344 = vmatpush1.msra.mxu0 0.0
    %1345 = vmatprep.subr.mxu0 0.0
    %1346 = vmatpush1.msra.mxu0 0.0
    %1347 = vmatprep.mubr.f32.mxu0 0.0
    %1348 = vmatmul.mubr.f32.gmra.mrb[0].mxu0 %v1260
    %v1349 = vpop.f32.mrb[0].mxu0
    %v1350 = vadd.f32 %v1257, %v1349
    %v1351 = vpop.f32.mrb[0].mxu0
    %1352 = vmatprep.mubr.f32.mxu0 0.0
    %1353 = vmatmul.mubr.f32.gmra.mrb[0].mxu0 %v1263
    %v1354 = vpop.f32.mrb[0].mxu0
    %v1355 = vadd.f32 %v1257, %v1354
    %v1356 = vpop.f32.mrb[0].mxu0
    %1357 = vmatprep.mubr.f32.mxu0 0.0
    %1358 = vmatmul.mubr.f32.gmra.mrb[0].mxu0 %v1266
    %v1359 = vpop.f32.mrb[0].mxu0
    %v1360 = vadd.f32 %v1257, %v1359
    %v1361 = vpop.f32.mrb[0].mxu0
    %1362 = vmatprep.mubr.f32.mxu0 0.0
    %1363 = vmatmul.mubr.f32.gmra.mrb[0].mxu0 %v1269
    %v1364 = vpop.f32.mrb[0].mxu0
    %v1365 = vadd.f32 %v1257, %v1364
    %v1366 = vpop.f32.mrb[0].mxu0
    %1367 = vmatprep.mubr.f32.mxu0 0.0
    %1368 = vmatmul.mubr.f32.gmra.mrb[0].mxu0 %v1272
    %v1369 = vpop.f32.mrb[0].mxu0
    %v1370 = vadd.f32 %v1257, %v1369
    %v1371 = vpop.f32.mrb[0].mxu0
    %1372 = vmatprep.mubr.f32.mxu0 0.0
    %1373 = vmatmul.mubr.f32.gmra.mrb[0].mxu0 %v1275
    %v1374 = vpop.f32.mrb[0].mxu0
    %v1375 = vadd.f32 %v1257, %v1374
    %v1376 = vpop.f32.mrb[0].mxu0
    %1377 = vmatprep.mubr.f32.mxu0 0.0
    %1378 = vmatmul.mubr.f32.gmra.mrb[0].mxu0 %v1278
    %v1379 = vpop.f32.mrb[0].mxu0
    %v1380 = vadd.f32 %v1257, %v1379
    %v1381 = vpop.f32.mrb[0].mxu0
    %1382 = vmatprep.mubr.f32.mxu0 0.0
    %1383 = vmatmul.mubr.f32.gmra.mrb[0].mxu0 %v1281
    %v1384 = vpop.f32.mrb[0].mxu0
    %v1385 = vadd.f32 %v1257, %v1384
    %v1386 = vpop.f32.mrb[0].mxu0
    %1387 = vdwg.mxu0
    %v1388 = vmax.f32 %v1350, 0.0
    %v1389 = vmax.f32 %v1355, 0.0
    %v1390 = vmax.f32 %v1360, 0.0
    %v1391 = vmax.f32 %v1365, 0.0
    %v1392 = vmax.f32 %v1370, 0.0
    %v1393 = vmax.f32 %v1375, 0.0
    %v1394 = vmax.f32 %v1380, 0.0
    %v1395 = vmax.f32 %v1385, 0.0
    %v1396 = vld [vmem:[%s8] sm:$0xff]
    %v1397 = vld [vmem:[%s8 + $0x8] sm:$0xff]
    %v1398 = vld [vmem:[%s8 + $0x10] sm:$0xff]
    %v1399 = vld [vmem:[%s8 + $0x18] sm:$0xff]
    %v1400 = vld [vmem:[%s8 + $0x20] sm:$0xff]
    %v1401 = vld [vmem:[%s8 + $0x28] sm:$0xff]
    %v1402 = vld [vmem:[%s8 + $0x30] sm:$0xff]
    %v1403 = vld [vmem:[%s8 + $0x38] sm:$0xff]
    %v1404 = vld [vmem:[#allocation4] sm:$0x1]
    %v1406 = vlaneseq
    %v1407 = vshrl.u32 %v1406, 7
    %v1408 = vsub.s32 0, %v1407
    %v1409 = vrot.slane %v1404, %v1408
    %v1412 = vsel %vm395, %v1388, 0
    %v1415 = vsel %vm395, %v1389, 0
    %v1418 = vsel %vm395, %v1390, 0
    %v1421 = vsel %vm395, %v1391, 0
    %v1424 = vsel %vm395, %v1392, 0
    %v1427 = vsel %vm395, %v1393, 0
    %v1430 = vsel %vm395, %v1394, 0
    %v1433 = vsel %vm395, %v1395, 0
    %1435 = vmatprep.subr.mxu0 0.0
    %1436 = vmatpush1.msra.mxu0 %v1396
    %1437 = vmatprep.subr.mxu0 0.0
    %1438 = vmatpush1.msra.mxu0 %v1397
    %1439 = vmatprep.subr.mxu0 0.0
    %1440 = vmatpush1.msra.mxu0 %v1398
    %1441 = vmatprep.subr.mxu0 0.0
    %1442 = vmatpush1.msra.mxu0 %v1399
    %1443 = vmatprep.subr.mxu0 0.0
    %1444 = vmatpush1.msra.mxu0 %v1400
    %1445 = vmatprep.subr.mxu0 0.0
    %1446 = vmatpush1.msra.mxu0 %v1401
    %1447 = vmatprep.subr.mxu0 0.0
    %1448 = vmatpush1.msra.mxu0 %v1402
    %1449 = vmatprep.subr.mxu0 0.0
    %1450 = vmatpush1.msra.mxu0 %v1403
    %1451 = vmatprep.subr.mxu0 0.0
    %1452 = vmatpush1.msra.mxu0 0.0
    %1453 = vmatprep.subr.mxu0 0.0
    %1454 = vmatpush1.msra.mxu0 0.0
    %1455 = vmatprep.subr.mxu0 0.0
    %1456 = vmatpush1.msra.mxu0 0.0
    %1457 = vmatprep.subr.mxu0 0.0
    %1458 = vmatpush1.msra.mxu0 0.0
    %1459 = vmatprep.subr.mxu0 0.0
    %1460 = vmatpush1.msra.mxu0 0.0
    %1461 = vmatprep.subr.mxu0 0.0
    %1462 = vmatpush1.msra.mxu0 0.0
    %1463 = vmatprep.subr.mxu0 0.0
    %1464 = vmatpush1.msra.mxu0 0.0
    %1465 = vmatprep.subr.mxu0 0.0
    %1466 = vmatpush1.msra.mxu0 0.0
    %1467 = vmatprep.subr.mxu0 0.0
    %1468 = vmatpush1.msra.mxu0 0.0
    %1469 = vmatprep.subr.mxu0 0.0
    %1470 = vmatpush1.msra.mxu0 0.0
    %1471 = vmatprep.subr.mxu0 0.0
    %1472 = vmatpush1.msra.mxu0 0.0
    %1473 = vmatprep.subr.mxu0 0.0
    %1474 = vmatpush1.msra.mxu0 0.0
    %1475 = vmatprep.subr.mxu0 0.0
    %1476 = vmatpush1.msra.mxu0 0.0
    %1477 = vmatprep.subr.mxu0 0.0
    %1478 = vmatpush1.msra.mxu0 0.0
    %1479 = vmatprep.subr.mxu0 0.0
    %1480 = vmatpush1.msra.mxu0 0.0
    %1481 = vmatprep.subr.mxu0 0.0
    %1482 = vmatpush1.msra.mxu0 0.0
    %1483 = vmatprep.subr.mxu0 0.0
    %1484 = vmatpush1.msra.mxu0 0.0
    %1485 = vmatprep.subr.mxu0 0.0
    %1486 = vmatpush1.msra.mxu0 0.0
    %1487 = vmatprep.subr.mxu0 0.0
    %1488 = vmatpush1.msra.mxu0 0.0
    %1489 = vmatprep.subr.mxu0 0.0
    %1490 = vmatpush1.msra.mxu0 0.0
    %1491 = vmatprep.subr.mxu0 0.0
    %1492 = vmatpush1.msra.mxu0 0.0
    %1493 = vmatprep.subr.mxu0 0.0
    %1494 = vmatpush1.msra.mxu0 0.0
    %1495 = vmatprep.subr.mxu0 0.0
    %1496 = vmatpush1.msra.mxu0 0.0
    %1497 = vmatprep.subr.mxu0 0.0
    %1498 = vmatpush1.msra.mxu0 0.0
    %1499 = vmatprep.mubr.f32.mxu0 0.0
    %1500 = vmatmul.mubr.f32.gmra.mrb[0].mxu0 %v1412
    %v1501 = vpop.f32.mrb[0].mxu0
    %v1502 = vadd.f32 %v1409, %v1501
    %v1503 = vpop.f32.mrb[0].mxu0
    %1504 = vmatprep.mubr.f32.mxu0 0.0
    %1505 = vmatmul.mubr.f32.gmra.mrb[0].mxu0 %v1415
    %v1506 = vpop.f32.mrb[0].mxu0
    %v1507 = vadd.f32 %v1409, %v1506
    %v1508 = vpop.f32.mrb[0].mxu0
    %1509 = vmatprep.mubr.f32.mxu0 0.0
    %1510 = vmatmul.mubr.f32.gmra.mrb[0].mxu0 %v1418
    %v1511 = vpop.f32.mrb[0].mxu0
    %v1512 = vadd.f32 %v1409, %v1511
    %v1513 = vpop.f32.mrb[0].mxu0
    %1514 = vmatprep.mubr.f32.mxu0 0.0
    %1515 = vmatmul.mubr.f32.gmra.mrb[0].mxu0 %v1421
    %v1516 = vpop.f32.mrb[0].mxu0
    %v1517 = vadd.f32 %v1409, %v1516
    %v1518 = vpop.f32.mrb[0].mxu0
    %1519 = vmatprep.mubr.f32.mxu0 0.0
    %1520 = vmatmul.mubr.f32.gmra.mrb[0].mxu0 %v1424
    %v1521 = vpop.f32.mrb[0].mxu0
    %v1522 = vadd.f32 %v1409, %v1521
    %v1523 = vpop.f32.mrb[0].mxu0
    %1524 = vmatprep.mubr.f32.mxu0 0.0
    %1525 = vmatmul.mubr.f32.gmra.mrb[0].mxu0 %v1427
    %v1526 = vpop.f32.mrb[0].mxu0
    %v1527 = vadd.f32 %v1409, %v1526
    %v1528 = vpop.f32.mrb[0].mxu0
    %1529 = vmatprep.mubr.f32.mxu0 0.0
    %1530 = vmatmul.mubr.f32.gmra.mrb[0].mxu0 %v1430
    %v1531 = vpop.f32.mrb[0].mxu0
    %v1532 = vadd.f32 %v1409, %v1531
    %v1533 = vpop.f32.mrb[0].mxu0
    %1534 = vmatprep.mubr.f32.mxu0 0.0
    %1535 = vmatmul.mubr.f32.gmra.mrb[0].mxu0 %v1433
    %v1536 = vpop.f32.mrb[0].mxu0
    %v1537 = vadd.f32 %v1409, %v1536
    %v1538 = vpop.f32.mrb[0].mxu0
    %1539 = vdwg.mxu0
    %vm1540 = vcmask 7168
    %v1541 = vsel %vm1540, %v1502, -inf
    %v1542 = vsel %vm1540, %v1507, -inf
    %v1543 = vsel %vm1540, %v1512, -inf
    %v1544 = vsel %vm1540, %v1517, -inf
    %v1545 = vsel %vm1540, %v1522, -inf
    %v1546 = vmax.f32 %v1541, %v1545
    %v1547 = vsel %vm1540, %v1527, -inf
    %v1548 = vmax.f32 %v1542, %v1547
    %v1549 = vsel %vm1540, %v1532, -inf
    %v1550 = vmax.f32 %v1543, %v1549
    %v1551 = vsel %vm1540, %v1537, -inf
    %v1552 = vmax.f32 %v1544, %v1551
    %v1553 = vmax.f32 %v1546, %v1548
    %v1554 = vmax.f32 %v1550, %v1552
    %v1555 = vmax.f32 %v1553, %v1554
    %v1556 = vsub.f32 %v1502, %v1555
    %v1557 = vsub.f32 %v1507, %v1555
    %v1558 = vsub.f32 %v1512, %v1555
    %v1559 = vsub.f32 %v1517, %v1555
    %v1560 = vsub.f32 %v1522, %v1555
    %v1561 = vsub.f32 %v1527, %v1555
    %v1562 = vsub.f32 %v1532, %v1555
    %v1563 = vsub.f32 %v1537, %v1555
    %v1564 = vmul.f32 %v1556, 1.442695
    %v1565 = vpow.pop %v1564
    %v1566 = vmul.f32 %v1557, 1.442695
    %v1567 = vpow.pop %v1566
    %v1568 = vmul.f32 %v1558, 1.442695
    %v1569 = vpow.pop %v1568
    %v1570 = vmul.f32 %v1559, 1.442695
    %v1571 = vpow.pop %v1570
    %v1572 = vmul.f32 %v1560, 1.442695
    %v1573 = vpow.pop %v1572
    %v1574 = vmul.f32 %v1561, 1.442695
    %v1575 = vpow.pop %v1574
    %v1576 = vmul.f32 %v1562, 1.442695
    %v1577 = vpow.pop %v1576
    %v1578 = vmul.f32 %v1563, 1.442695
    %v1579 = vpow.pop %v1578
    %v1580 = vsel %vm1540, %v1565, 0.0
    %v1581 = vsel %vm1540, %v1567, 0.0
    %v1582 = vadd.f32 %v1580, %v1581
    %v1583 = vsel %vm1540, %v1569, 0.0
    %v1584 = vadd.f32 %v1582, %v1583
    %v1585 = vsel %vm1540, %v1571, 0.0
    %v1586 = vadd.f32 %v1584, %v1585
    %v1587 = vsel %vm1540, %v1573, 0.0
    %v1588 = vadd.f32 %v1586, %v1587
    %v1589 = vsel %vm1540, %v1575, 0.0
    %v1590 = vadd.f32 %v1588, %v1589
    %v1591 = vsel %vm1540, %v1577, 0.0
    %v1592 = vadd.f32 %v1590, %v1591
    %v1593 = vsel %vm1540, %v1579, 0.0
    %v1594 = vadd.f32 %v1592, %v1593
    %v1595 = vrcp.pop %v1594
    %v1596 = vmul.f32 %v1565, %v1595
    %v1597 = vmul.f32 %v1567, %v1595
    %v1598 = vmul.f32 %v1569, %v1595
    %v1599 = vmul.f32 %v1571, %v1595
    %v1600 = vmul.f32 %v1573, %v1595
    %v1601 = vmul.f32 %v1575, %v1595
    %v1602 = vmul.f32 %v1577, %v1595
    %v1603 = vmul.f32 %v1579, %v1595
    %1605 = vset.pattern.permute.xlu0 0
    %1606 = vperm.xlu0 %1605, %v1596
    %v1607 = vpop.permute.xlu0 %1606
    %1610 = vset.pattern.permute.xlu0 0
    %1611 = vperm.xlu0 %1610, %v1597
    %v1612 = vpop.permute.xlu0 %1611
    %1615 = vset.pattern.permute.xlu0 0
    %1616 = vperm.xlu0 %1615, %v1598
    %v1617 = vpop.permute.xlu0 %1616
    %1620 = vset.pattern.permute.xlu0 0
    %1621 = vperm.xlu0 %1620, %v1599
    %v1622 = vpop.permute.xlu0 %1621
    %1625 = vset.pattern.permute.xlu0 0
    %1626 = vperm.xlu0 %1625, %v1600
    %v1627 = vpop.permute.xlu0 %1626
    %1630 = vset.pattern.permute.xlu0 0
    %1631 = vperm.xlu0 %1630, %v1601
    %v1632 = vpop.permute.xlu0 %1631
    %1635 = vset.pattern.permute.xlu0 0
    %1636 = vperm.xlu0 %1635, %v1602
    %v1637 = vpop.permute.xlu0 %1636
    %1640 = vset.pattern.permute.xlu0 0
    %1641 = vperm.xlu0 %1640, %v1603
    %v1642 = vpop.permute.xlu0 %1641
    %v1644 = vmul.f32 %v1236, %v1607
    %v1645 = vmul.f32 %v1237, %v1612
    %v1646 = vmul.f32 %v1238, %v1617
    %v1647 = vmul.f32 %v1239, %v1622
    %v1648 = vmul.f32 %v1240, %v1627
    %v1649 = vmul.f32 %v1241, %v1632
    %v1650 = vmul.f32 %v1242, %v1637
    %v1651 = vmul.f32 %v1243, %v1642
    %v1652 = vsel %vm395, %v1644, 0.0
    %v1653 = vsel %vm395, %v1645, 0.0
    %v1654 = vadd.f32 %v1652, %v1653
    %v1655 = vsel %vm395, %v1646, 0.0
    %v1656 = vadd.f32 %v1654, %v1655
    %v1657 = vsel %vm395, %v1647, 0.0
    %v1658 = vadd.f32 %v1656, %v1657
    %v1659 = vsel %vm395, %v1648, 0.0
    %v1660 = vadd.f32 %v1658, %v1659
    %v1661 = vsel %vm395, %v1649, 0.0
    %v1662 = vadd.f32 %v1660, %v1661
    %v1663 = vsel %vm395, %v1650, 0.0
    %v1664 = vadd.f32 %v1662, %v1663
    %v1665 = vsel %vm395, %v1651, 0.0
    %v1666 = vadd.f32 %v1664, %v1665
    %v1667 = vsel %vm395, %v1236, 0.0
    %v1668 = vsel %vm395, %v1237, 0.0
    %v1669 = vadd.f32 %v1667, %v1668
    %v1670 = vsel %vm395, %v1238, 0.0
    %v1671 = vadd.f32 %v1669, %v1670
    %v1672 = vsel %vm395, %v1239, 0.0
    %v1673 = vadd.f32 %v1671, %v1672
    %v1674 = vsel %vm395, %v1240, 0.0
    %v1675 = vadd.f32 %v1673, %v1674
    %v1676 = vsel %vm395, %v1241, 0.0
    %v1677 = vadd.f32 %v1675, %v1676
    %v1678 = vsel %vm395, %v1242, 0.0
    %v1679 = vadd.f32 %v1677, %v1678
    %v1680 = vsel %vm395, %v1243, 0.0
    %v1681 = vadd.f32 %v1679, %v1680
    %v1682 = vld [vmem:[%s10] sm:$0xff]
    %v1683 = vld [vmem:[%s10 + $0x8] sm:$0xff]
    %v1684 = vld [vmem:[%s10 + $0x10] sm:$0xff]
    %v1685 = vld [vmem:[%s10 + $0x18] sm:$0xff]
    %v1686 = vld [vmem:[%s10 + $0x20] sm:$0xff]
    %v1687 = vld [vmem:[%s10 + $0x28] sm:$0xff]
    %v1688 = vld [vmem:[%s10 + $0x30] sm:$0xff]
    %v1689 = vld [vmem:[%s10 + $0x38] sm:$0xff]
    %v1690 = vld [vmem:[%s11] sm:$0xff]
    %v1691 = vld [vmem:[%s11 + $0x8] sm:$0xff]
    %v1692 = vld [vmem:[%s11 + $0x10] sm:$0xff]
    %v1693 = vld [vmem:[%s11 + $0x18] sm:$0xff]
    %v1694 = vld [vmem:[%s11 + $0x20] sm:$0xff]
    %v1695 = vld [vmem:[%s11 + $0x28] sm:$0xff]
    %v1696 = vld [vmem:[%s11 + $0x30] sm:$0xff]
    %v1697 = vld [vmem:[%s11 + $0x38] sm:$0xff]
    %v1699 = vsel %vm395, %v1681, 0
    %1701 = vmatprep.subr.mxu0 0.0
    %1702 = vmatpush1.msra.mxu0 %v1690
    %1703 = vmatprep.subr.mxu0 0.0
    %1704 = vmatpush1.msra.mxu0 %v1691
    %1705 = vmatprep.subr.mxu0 0.0
    %1706 = vmatpush1.msra.mxu0 %v1692
    %1707 = vmatprep.subr.mxu0 0.0
    %1708 = vmatpush1.msra.mxu0 %v1693
    %1709 = vmatprep.subr.mxu0 0.0
    %1710 = vmatpush1.msra.mxu0 %v1694
    %1711 = vmatprep.subr.mxu0 0.0
    %1712 = vmatpush1.msra.mxu0 %v1695
    %1713 = vmatprep.subr.mxu0 0.0
    %1714 = vmatpush1.msra.mxu0 %v1696
    %1715 = vmatprep.subr.mxu0 0.0
    %1716 = vmatpush1.msra.mxu0 %v1697
    %1717 = vmatprep.subr.mxu0 0.0
    %1718 = vmatpush1.msra.mxu0 0.0
    %1719 = vmatprep.subr.mxu0 0.0
    %1720 = vmatpush1.msra.mxu0 0.0
    %1721 = vmatprep.subr.mxu0 0.0
    %1722 = vmatpush1.msra.mxu0 0.0
    %1723 = vmatprep.subr.mxu0 0.0
    %1724 = vmatpush1.msra.mxu0 0.0
    %1725 = vmatprep.subr.mxu0 0.0
    %1726 = vmatpush1.msra.mxu0 0.0
    %1727 = vmatprep.subr.mxu0 0.0
    %1728 = vmatpush1.msra.mxu0 0.0
    %1729 = vmatprep.subr.mxu0 0.0
    %1730 = vmatpush1.msra.mxu0 0.0
    %1731 = vmatprep.subr.mxu0 0.0
    %1732 = vmatpush1.msra.mxu0 0.0
    %1733 = vmatprep.subr.mxu0 0.0
    %1734 = vmatpush1.msra.mxu0 0.0
    %1735 = vmatprep.subr.mxu0 0.0
    %1736 = vmatpush1.msra.mxu0 0.0
    %1737 = vmatprep.subr.mxu0 0.0
    %1738 = vmatpush1.msra.mxu0 0.0
    %1739 = vmatprep.subr.mxu0 0.0
    %1740 = vmatpush1.msra.mxu0 0.0
    %1741 = vmatprep.subr.mxu0 0.0
    %1742 = vmatpush1.msra.mxu0 0.0
    %1743 = vmatprep.subr.mxu0 0.0
    %1744 = vmatpush1.msra.mxu0 0.0
    %1745 = vmatprep.subr.mxu0 0.0
    %1746 = vmatpush1.msra.mxu0 0.0
    %1747 = vmatprep.subr.mxu0 0.0
    %1748 = vmatpush1.msra.mxu0 0.0
    %1749 = vmatprep.subr.mxu0 0.0
    %1750 = vmatpush1.msra.mxu0 0.0
    %1751 = vmatprep.subr.mxu0 0.0
    %1752 = vmatpush1.msra.mxu0 0.0
    %1753 = vmatprep.subr.mxu0 0.0
    %1754 = vmatpush1.msra.mxu0 0.0
    %1755 = vmatprep.subr.mxu0 0.0
    %1756 = vmatpush1.msra.mxu0 0.0
    %1757 = vmatprep.subr.mxu0 0.0
    %1758 = vmatpush1.msra.mxu0 0.0
    %1759 = vmatprep.subr.mxu0 0.0
    %1760 = vmatpush1.msra.mxu0 0.0
    %1761 = vmatprep.subr.mxu0 0.0
    %1762 = vmatpush1.msra.mxu0 0.0
    %1763 = vmatprep.subr.mxu0 0.0
    %1764 = vmatpush1.msra.mxu0 0.0
    %1765 = vmatprep.mubr.f32.mxu0 0.0
    %1766 = vmatmul.mubr.f32.gmra.mrb[0].mxu0 %v1699
    %v1767 = vpop.f32.mrb[0].mxu0
    %v1768 = vadd.f32 0.0, %v1767
    %v1769 = vpop.f32.mrb[0].mxu0
    %1770 = vdwg.mxu0
    %v1772 = vsel %vm395, %v1666, 0
    %1774 = vmatprep.subr.mxu0 0.0
    %1775 = vmatpush1.msra.mxu0 %v1682
    %1776 = vmatprep.subr.mxu0 0.0
    %1777 = vmatpush1.msra.mxu0 %v1683
    %1778 = vmatprep.subr.mxu0 0.0
    %1779 = vmatpush1.msra.mxu0 %v1684
    %1780 = vmatprep.subr.mxu0 0.0
    %1781 = vmatpush1.msra.mxu0 %v1685
    %1782 = vmatprep.subr.mxu0 0.0
    %1783 = vmatpush1.msra.mxu0 %v1686
    %1784 = vmatprep.subr.mxu0 0.0
    %1785 = vmatpush1.msra.mxu0 %v1687
    %1786 = vmatprep.subr.mxu0 0.0
    %1787 = vmatpush1.msra.mxu0 %v1688
    %1788 = vmatprep.subr.mxu0 0.0
    %1789 = vmatpush1.msra.mxu0 %v1689
    %1790 = vmatprep.subr.mxu0 0.0
    %1791 = vmatpush1.msra.mxu0 0.0
    %1792 = vmatprep.subr.mxu0 0.0
    %1793 = vmatpush1.msra.mxu0 0.0
    %1794 = vmatprep.subr.mxu0 0.0
    %1795 = vmatpush1.msra.mxu0 0.0
    %1796 = vmatprep.subr.mxu0 0.0
    %1797 = vmatpush1.msra.mxu0 0.0
    %1798 = vmatprep.subr.mxu0 0.0
    %1799 = vmatpush1.msra.mxu0 0.0
    %1800 = vmatprep.subr.mxu0 0.0
    %1801 = vmatpush1.msra.mxu0 0.0
    %1802 = vmatprep.subr.mxu0 0.0
    %1803 = vmatpush1.msra.mxu0 0.0
    %1804 = vmatprep.subr.mxu0 0.0
    %1805 = vmatpush1.msra.mxu0 0.0
    %1806 = vmatprep.subr.mxu0 0.0
    %1807 = vmatpush1.msra.mxu0 0.0
    %1808 = vmatprep.subr.mxu0 0.0
    %1809 = vmatpush1.msra.mxu0 0.0
    %1810 = vmatprep.subr.mxu0 0.0
    %1811 = vmatpush1.msra.mxu0 0.0
    %1812 = vmatprep.subr.mxu0 0.0
    %1813 = vmatpush1.msra.mxu0 0.0
    %1814 = vmatprep.subr.mxu0 0.0
    %1815 = vmatpush1.msra.mxu0 0.0
    %1816 = vmatprep.subr.mxu0 0.0
    %1817 = vmatpush1.msra.mxu0 0.0
    %1818 = vmatprep.subr.mxu0 0.0
    %1819 = vmatpush1.msra.mxu0 0.0
    %1820 = vmatprep.subr.mxu0 0.0
    %1821 = vmatpush1.msra.mxu0 0.0
    %1822 = vmatprep.subr.mxu0 0.0
    %1823 = vmatpush1.msra.mxu0 0.0
    %1824 = vmatprep.subr.mxu0 0.0
    %1825 = vmatpush1.msra.mxu0 0.0
    %1826 = vmatprep.subr.mxu0 0.0
    %1827 = vmatpush1.msra.mxu0 0.0
    %1828 = vmatprep.subr.mxu0 0.0
    %1829 = vmatpush1.msra.mxu0 0.0
    %1830 = vmatprep.subr.mxu0 0.0
    %1831 = vmatpush1.msra.mxu0 0.0
    %1832 = vmatprep.subr.mxu0 0.0
    %1833 = vmatpush1.msra.mxu0 0.0
    %1834 = vmatprep.subr.mxu0 0.0
    %1835 = vmatpush1.msra.mxu0 0.0
    %1836 = vmatprep.subr.mxu0 0.0
    %1837 = vmatpush1.msra.mxu0 0.0
    %1838 = vmatprep.mubr.f32.mxu0 0.0
    %1839 = vmatmul.mubr.f32.gmra.mrb[0].mxu0 %v1772
    %v1840 = vpop.f32.mrb[0].mxu0
    %v1841 = vadd.f32 %v1768, %v1840
    %v1842 = vpop.f32.mrb[0].mxu0
    %1843 = vdwg.mxu0
    %v1844 = vld [vmem:[%s12] sm:$0x1]
    %v1846 = vlaneseq
    %v1847 = vshrl.u32 %v1846, 7
    %v1848 = vsub.s32 0, %v1847
    %v1849 = vrot.slane %v1844, %v1848
    %v1851 = vadd.f32 %v1841, %v1849
    %vm1852 = vcmask 39936
    %1853 = vst.msk [vmem:[#allocation5] sm:$0xff] %vm1852, %v1851
    // Predicated region
    $region54: #{tpu_custom_call.1} parent=1 // pred_check
      _
    $region55: #{tpu_custom_call.1} parent=1 // pred_check_branch
      %1855 = sbr.rel (0) target = $region57
    $region56: #{tpu_custom_call.1} parent=1 // pred_region
      %s1857 = ssub.s32 128, 128
      %1858 = vsyncadd [#allocation6], %s1857
      %s1860 = sshll.u32 [#allocation5], 4
      %s1861 = int_to_ptr.vmem [resolvable:$true] %s1860
      %1863 = dma.vmem_to_hbm [thread:$0]  %s1861, 128, %s13, [#allocation6]
    $region57: #{tpu_custom_call.1} parent=1 // pred_fallthru
      _
    // Predicated region
    $region58: #{tpu_custom_call.1} parent=1 // pred_check
      _
    $region59: #{tpu_custom_call.1} parent=1 // pred_check_branch
      %1865 = sbr.rel (0) target = $region61
    $region60: #{tpu_custom_call.1} parent=1 // pred_region
      %1866 = dma.done [#allocation6], 128
    $region61: #{tpu_custom_call.1} parent=1 // pred_fallthru
      _
    %1867 = vsyncpa [#allocation6], 1

</llo_original>
